<compile_context>
chip_gen: v6e
topology: v6e:2x2x1
jax: 0.10.0
libtpu: 0.0.40
codegen_flags: <defaults>
</compile_context>

<pallas_src>
import jax
import jax.numpy as jnp
from jax import lax
from jax.experimental import pallas as pl
from jax.experimental.pallas import tpu as pltpu


# ----------------------------------------------------------------------------
# Pallas kernel (one batch element per grid step, sub-pixel packed layout)
# ----------------------------------------------------------------------------
def _up_c3_aff_kernel(x1_ref, x2_ref, wsub_ref, bsub_ref,
                      wl1_ref, bl1_ref, wl2_ref, bl2_ref,
                      wg1_ref, bg1_ref, wg2_ref, bg2_ref,
                      o_ref, xpad_ref):
    _, H, W, Cin = x1_ref.shape
    _, HW, C4 = o_ref.shape                    # HW = H*W (low-res), C4 = 4*Cout

    # Zero-pad the low-res tile in VMEM (replaces the wrapper-side HBM pad pass).
    xpad_ref[...] = jnp.zeros_like(xpad_ref)
    xpad_ref[1:H + 1, 1:W + 1, :] = x1_ref[0]
    xpad = xpad_ref[...]                       # (H+2, W+2, Cin)

    # im2col over the 3x3 low-res neighbourhood -> ONE MXU matmul produces all four sub-pixel
    # outputs of Upsample(2x nearest) + Conv3x3 (+ folded BN) at once.
    cols = [xpad[dh:dh + H, dw:dw + W, :].reshape(HW, Cin)
            for dh in range(3) for dw in range(3)]
    patches = jnp.concatenate(cols, axis=1)                                    # (HW, 9*Cin)

    y = jnp.dot(patches, wsub_ref[...], preferred_element_type=jnp.float32) + bsub_ref[...]
    y = jnp.maximum(y, 0.0)                                                    # (HW, 4*Cout)

    x2 = x2_ref[0]                                                             # (HW, 4*Cout)
    xa = y + x2

    # AFF local branch: 1x1 convs as block-diagonal matmuls over the 4 sub-pixel groups.
    xl = jnp.dot(xa, wl1_ref[...], preferred_element_type=jnp.float32) + bl1_ref[...]
    xl = jnp.maximum(xl, 0.0)
    xl = jnp.dot(xl, wl2_ref[...], preferred_element_type=jnp.float32) + bl2_ref[...]

    # AFF global branch: full-resolution global-average-pool and the per-group broadcast are
    # already folded into wg1_eff / tiled wg2 (built in the wrapper).
    m = jnp.mean(xa, axis=0, keepdims=True)                                    # (1, 4*Cout)
    xg = jnp.dot(m, wg1_ref[...], preferred_element_type=jnp.float32) + bg1_ref[...]
    xg = jnp.maximum(xg, 0.0)
    xg = jnp.dot(xg, wg2_ref[...], preferred_element_type=jnp.float32) + bg2_ref[...]   # (1, 4*Cout)

    wei = jax.nn.sigmoid(xl + xg)
    o_ref[0] = (2.0 * y * wei + 2.0 * x2 * (1.0 - wei)).astype(o_ref.dtype)


# ----------------------------------------------------------------------------
# Wrapper-side weight packing
# ----------------------------------------------------------------------------
def _merge_subpixel_conv_weight(wconv):
    """wconv: (3,3,Cin,Cout) HWIO, BN-folded.

    Folds Upsample(2x nearest)+Conv3x3 into four merged convs over the 3x3 low-res halo.
    Returns (9*Cin, 4*Cout): rows ordered (dh, dw, cin); cols ordered (a, b, cout).
    """
    Cin, Cout = wconv.shape[2], wconv.shape[3]
    w_sub = jnp.zeros((3, 3, Cin, 2, 2, Cout), wconv.dtype)
    for a in range(2):
        for b in range(2):
            for kh in range(3):
                for kw in range(3):
                    dh = (a + kh - 1) // 2 + 1      # low-res row offset in {0,1,2}
                    dw = (b + kw - 1) // 2 + 1      # low-res col offset in {0,1,2}
                    w_sub = w_sub.at[dh, dw, :, a, b, :].add(wconv[kh, kw])
    return w_sub.reshape(9 * Cin, 4 * Cout)


def _full_spec(arr):
    """Whole-array BlockSpec with an index map of matching rank (fixes the bias rank bug)."""
    rank = arr.ndim

    def imap(n):
        return (0,) * rank

    return pl.BlockSpec(arr.shape, imap)


def up_c3_aff_pallas(x1_nchw, x2_nchw, params):
    """x1: (N, Cin, H, W); x2: (N, Cout, 2H, 2W). Returns NCHW (N, Cout, 2H, 2W)."""
    (wconv_f, bconv_f, wl1_f, bl1_f, wl2_f, bl2_f, wg1_f, bg1_f, wg2_f, bg2_f) = params
    N, Cin, H, W = x1_nchw.shape
    Cout = x2_nchw.shape[1]
    Cint = wl1_f.shape[1]
    HW, C4 = H * W, 4 * Cout

    # Low-res input, channels-last (small tensor; halo padding happens inside the kernel).
    x1_nhwc = jnp.transpose(x1_nchw, (0, 2, 3, 1))                       # (N, H, W, Cin)

    # Skip tensor in sub-pixel packed layout:
    #   x2_sub[n, i*W+j, (a*2+b)*Cout + c] = x2[n, c, 2i+a, 2j+b]
    x2_sub = x2_nchw.reshape(N, Cout, H, 2, W, 2)                        # (n, c, i, a, j, b)
    x2_sub = jnp.transpose(x2_sub, (0, 2, 4, 3, 5, 1)).reshape(N, HW, C4)

    # Kernel-side weights.
    w_sub = _merge_subpixel_conv_weight(wconv_f)                         # (9*Cin, 4*Cout)
    b_sub = jnp.tile(bconv_f.reshape(1, Cout), (1, 4))                   # (1, 4*Cout)
    eye4 = jnp.eye(4, dtype=wl1_f.dtype)
    wl1_bd = jnp.kron(eye4, wl1_f)                                       # (4*Cout, 4*Cint)
    wl2_bd = jnp.kron(eye4, wl2_f)                                       # (4*Cint, 4*Cout)
    bl1_t = jnp.tile(bl1_f.reshape(1, Cint), (1, 4))                     # (1, 4*Cint)
    bl2_t = jnp.tile(bl2_f.reshape(1, Cout), (1, 4))                     # (1, 4*Cout)
    wg1_eff = 0.25 * jnp.tile(wg1_f, (4, 1))                             # (4*Cout, Cint): folds group average
    bg1_r = bg1_f.reshape(1, Cint)
    wg2_t = jnp.tile(wg2_f, (1, 4))                                      # (Cint, 4*Cout): folds group broadcast
    bg2_t = jnp.tile(bg2_f.reshape(1, Cout), (1, 4))                     # (1, 4*Cout)

    weights = (w_sub, b_sub, wl1_bd, bl1_t, wl2_bd, bl2_t, wg1_eff, bg1_r, wg2_t, bg2_t)

    out_sub = pl.pallas_call(
        _up_c3_aff_kernel,
        out_shape=jax.ShapeDtypeStruct((N, HW, C4), jnp.float32),
        grid=(N,),
        in_specs=[
            pl.BlockSpec((1, H, W, Cin), lambda n: (n, 0, 0, 0)),
            pl.BlockSpec((1, HW, C4), lambda n: (n, 0, 0)),
        ] + [_full_spec(w) for w in weights],
        out_specs=pl.BlockSpec((1, HW, C4), lambda n: (n, 0, 0)),
        scratch_shapes=[pltpu.VMEM((H + 2, W + 2, Cin), jnp.float32)],
        compiler_params=pltpu.CompilerParams(dimension_semantics=("parallel",)),
    )(x1_nhwc, x2_sub, *weights)

    # Unpack the sub-pixel layout straight to NCHW: this single fused transpose replaces the
    # NHWC->NCHW transpose we would need anyway (skip it entirely if the consumer takes NHWC).
    out = out_sub.reshape(N, H, W, 2, 2, Cout)                           # (n, i, j, a, b, c)
    out = jnp.transpose(out, (0, 5, 1, 3, 2, 4)).reshape(N, Cout, 2 * H, 2 * W)
    return out


# ----------------------------------------------------------------------------
# Deterministic parameter construction + BN folding (eval mode, eps = 1e-5)
# ----------------------------------------------------------------------------
def _fold_bn(w, b, gamma, beta, mean, var, eps=1e-5):
    """w: (..., Cout), b: (Cout,). Returns folded (w', b') for y = x @ w' + b'."""
    scale = gamma / jnp.sqrt(var + eps)
    return w * scale, b * scale + (beta - mean * scale)


def make_params(key, in_ch, out_ch, r=4):
    inter = max(1, out_ch // r)
    ks = jax.random.split(key, 8)

    def bn(c, off):
        gamma = 1.0 + 0.1 * jnp.cos(jnp.arange(c, dtype=jnp.float32) + off)
        beta = 0.05 * jnp.sin(jnp.arange(c, dtype=jnp.float32) + off)
        mean = 0.02 * jnp.arange(c, dtype=jnp.float32) - 0.03 * off
        var = 1.0 + 0.05 * jnp.arange(c, dtype=jnp.float32)
        return gamma, beta, mean, var

    # up-path 3x3 conv + BN
    wconv = 0.1 * jax.random.normal(ks[0], (3, 3, in_ch, out_ch), jnp.float32)   # HWIO
    bconv = 0.05 * jax.random.normal(ks[1], (out_ch,), jnp.float32)
    wconv_f, bconv_f = _fold_bn(wconv, bconv, *bn(out_ch, 0.0))

    # AFF local branch: 1x1(out->inter)+BN, ReLU, 1x1(inter->out)+BN
    wl1 = 0.2 * jax.random.normal(ks[2], (out_ch, inter), jnp.float32)
    bl1 = 0.05 * jax.random.normal(ks[3], (inter,), jnp.float32)
    wl1_f, bl1_f = _fold_bn(wl1, bl1, *bn(inter, 1.0))
    wl2 = 0.2 * jax.random.normal(ks[4], (inter, out_ch), jnp.float32)
    bl2 = 0.05 * jax.random.normal(ks[5], (out_ch,), jnp.float32)
    wl2_f, bl2_f = _fold_bn(wl2, bl2, *bn(out_ch, 2.0))

    # AFF global branch: avgpool, 1x1(out->inter)+BN, ReLU, 1x1(inter->out)+BN
    wg1 = 0.2 * jax.random.normal(ks[6], (out_ch, inter), jnp.float32)
    bg1 = 0.05 * jnp.sin(jnp.arange(inter, dtype=jnp.float32))
    wg1_f, bg1_f = _fold_bn(wg1, bg1, *bn(inter, 3.0))
    wg2 = 0.2 * jax.random.normal(ks[7], (inter, out_ch), jnp.float32)
    bg2 = 0.05 * jnp.cos(jnp.arange(out_ch, dtype=jnp.float32))
    wg2_f, bg2_f = _fold_bn(wg2, bg2, *bn(out_ch, 4.0))

    return (wconv_f, bconv_f, wl1_f, bl1_f, wl2_f, bl2_f,
            wg1_f, bg1_f, wg2_f, bg2_f)


# ----------------------------------------------------------------------------
# Pure-JAX reference (same folded params) for a correctness check
# ----------------------------------------------------------------------------
def reference(x1_nchw, x2_nchw, params):
    (wconv_f, bconv_f, wl1_f, bl1_f, wl2_f, bl2_f, wg1_f, bg1_f, wg2_f, bg2_f) = params
    up = jnp.repeat(jnp.repeat(x1_nchw, 2, axis=2), 2, axis=3)
    up_nhwc = jnp.transpose(up, (0, 2, 3, 1))
    x2 = jnp.transpose(x2_nchw, (0, 2, 3, 1))
    y = lax.conv_general_dilated(up_nhwc, wconv_f, (1, 1), 'SAME',
                                 dimension_numbers=('NHWC', 'HWIO', 'NHWC'))
    y = jax.nn.relu(y + bconv_f)
    xa = y + x2
    xl = jax.nn.relu(jnp.einsum('nhwc,cd->nhwd', xa, wl1_f) + bl1_f)
    xl = jnp.einsum('nhwd,dc->nhwc', xl, wl2_f) + bl2_f
    m = jnp.mean(xa, axis=(1, 2), keepdims=True)
    xg = jax.nn.relu(jnp.einsum('nhwc,cd->nhwd', m, wg1_f) + bg1_f)
    xg = jnp.einsum('nhwd,dc->nhwc', xg, wg2_f) + bg2_f
    wei = jax.nn.sigmoid(xl + xg)
    out = 2.0 * y * wei + 2.0 * x2 * (1.0 - wei)
    return jnp.transpose(out, (0, 3, 1, 2))


if __name__ == "__main__":
    N, in_ch, out_ch, H, W = 2, 8, 8, 8, 8       # x1 is 8x8 (upsampled to 16x16); x2 is 16x16

    key = jax.random.PRNGKey(0)
    k1, k2, kp = jax.random.split(key, 3)
    x1 = jax.random.normal(k1, (N, in_ch, H, W), jnp.float32)             # NCHW
    x2 = jax.random.normal(k2, (N, out_ch, 2 * H, 2 * W), jnp.float32)    # NCHW

    params = make_params(kp, in_ch, out_ch)

    out = jax.block_until_ready(up_c3_aff_pallas(x1, x2, params))
    ref = jax.block_until_ready(reference(x1, x2, params))

    assert out.shape == (N, out_ch, 2 * H, 2 * W)
    max_err = float(jnp.max(jnp.abs(out - ref)))
    assert jnp.allclose(out, ref, rtol=2e-4, atol=2e-4), max_err
    print("KERNEL_OK")
</pallas_src>

<mosaic_0001>
module attributes {stable_mosaic.version = 11 : i64} {
  func.func @_up_c3_aff_kernel(%arg0: i32, %arg1: memref<1x8x8x8xf32, #tpu.memory_space<vmem>>, %arg2: memref<1x64x32xf32, #tpu.memory_space<vmem>>, %arg3: memref<72x32xf32, #tpu.memory_space<vmem>>, %arg4: memref<1x32xf32, #tpu.memory_space<vmem>>, %arg5: memref<32x8xf32, #tpu.memory_space<vmem>>, %arg6: memref<1x8xf32, #tpu.memory_space<vmem>>, %arg7: memref<8x32xf32, #tpu.memory_space<vmem>>, %arg8: memref<1x32xf32, #tpu.memory_space<vmem>>, %arg9: memref<32x2xf32, #tpu.memory_space<vmem>>, %arg10: memref<1x2xf32, #tpu.memory_space<vmem>>, %arg11: memref<2x32xf32, #tpu.memory_space<vmem>>, %arg12: memref<1x32xf32, #tpu.memory_space<vmem>>, %arg13: memref<1x64x32xf32, #tpu.memory_space<vmem>>, %arg14: memref<10x10x8xf32, #tpu.memory_space<vmem>>) attributes {dimension_semantics = [#tpu.dimension_semantics<parallel>], iteration_bounds = array<i64: 2>, scalar_prefetch = 0 : i64, scratch_operands = 1 : i64, tpu.core_type = #tpu.core_type<tc>, window_params = [{transform_indices = @transform_0, window_bounds = array<i64: 1, 8, 8, 8>}, {transform_indices = @transform_1, window_bounds = array<i64: 1, 64, 32>}, {pipeline_mode = #tpu.pipeline_mode<synchronous>, transform_indices = @transform_2, window_bounds = array<i64: 72, 32>}, {pipeline_mode = #tpu.pipeline_mode<synchronous>, transform_indices = @transform_3, window_bounds = array<i64: 1, 32>}, {pipeline_mode = #tpu.pipeline_mode<synchronous>, transform_indices = @transform_4, window_bounds = array<i64: 32, 8>}, {pipeline_mode = #tpu.pipeline_mode<synchronous>, transform_indices = @transform_5, window_bounds = array<i64: 1, 8>}, {pipeline_mode = #tpu.pipeline_mode<synchronous>, transform_indices = @transform_6, window_bounds = array<i64: 8, 32>}, {pipeline_mode = #tpu.pipeline_mode<synchronous>, transform_indices = @transform_7, window_bounds = array<i64: 1, 32>}, {pipeline_mode = #tpu.pipeline_mode<synchronous>, transform_indices = @transform_8, window_bounds = array<i64: 32, 2>}, {pipeline_mode = #tpu.pipeline_mode<synchronous>, transform_indices = @transform_9, window_bounds = array<i64: 1, 2>}, {pipeline_mode = #tpu.pipeline_mode<synchronous>, transform_indices = @transform_10, window_bounds = array<i64: 2, 32>}, {pipeline_mode = #tpu.pipeline_mode<synchronous>, transform_indices = @transform_11, window_bounds = array<i64: 1, 32>}, {transform_indices = @transform_12, window_bounds = array<i64: 1, 64, 32>}]} {
    %cst = arith.constant 0.000000e+00 : f32
    %0 = vector.broadcast %cst : f32 to vector<10x10x8xf32>
    %c0 = arith.constant 0 : index
    %c0_0 = arith.constant 0 : index
    %c0_1 = arith.constant 0 : index
    %1 = vector.load %arg14[%c0, %c0_0, %c0_1] : memref<10x10x8xf32, #tpu.memory_space<vmem>>, vector<10x10x8xf32>
    tpu.vector_store %arg14[%c0, %c0_0, %c0_1], %0 {strides = array<i32>} : memref<10x10x8xf32, #tpu.memory_space<vmem>>, vector<10x10x8xf32>,
    %c0_2 = arith.constant 0 : index
    %c0_3 = arith.constant 0 : index
    %c0_4 = arith.constant 0 : index
    %c0_5 = arith.constant 0 : index
    %2 = vector.load %arg1[%c0_2, %c0_3, %c0_4, %c0_5] : memref<1x8x8x8xf32, #tpu.memory_space<vmem>>, vector<1x8x8x8xf32>
    %3 = vector.shape_cast %2 : vector<1x8x8x8xf32> to vector<8x8x8xf32>
    %c1 = arith.constant 1 : index
    %c1_6 = arith.constant 1 : index
    %c0_7 = arith.constant 0 : index
    %4 = vector.load %arg14[%c1, %c1_6, %c0_7] : memref<10x10x8xf32, #tpu.memory_space<vmem>>, vector<8x8x8xf32>
    tpu.vector_store %arg14[%c1, %c1_6, %c0_7], %3 {strides = array<i32>} : memref<10x10x8xf32, #tpu.memory_space<vmem>>, vector<8x8x8xf32>,
    %c0_8 = arith.constant 0 : index
    %c0_9 = arith.constant 0 : index
    %c0_10 = arith.constant 0 : index
    %5 = vector.load %arg14[%c0_8, %c0_9, %c0_10] : memref<10x10x8xf32, #tpu.memory_space<vmem>>, vector<10x10x8xf32>
    %6 = vector.extract_strided_slice %5 {offsets = [0, 0, 0], sizes = [8, 8, 8], strides = [1, 1, 1]} : vector<10x10x8xf32> to vector<8x8x8xf32>
    %7 = vector.shape_cast %6 : vector<8x8x8xf32> to vector<64x8xf32>
    %8 = vector.extract_strided_slice %5 {offsets = [0, 1, 0], sizes = [8, 8, 8], strides = [1, 1, 1]} : vector<10x10x8xf32> to vector<8x8x8xf32>
    %9 = vector.shape_cast %8 : vector<8x8x8xf32> to vector<64x8xf32>
    %10 = vector.extract_strided_slice %5 {offsets = [0, 2, 0], sizes = [8, 8, 8], strides = [1, 1, 1]} : vector<10x10x8xf32> to vector<8x8x8xf32>
    %11 = vector.shape_cast %10 : vector<8x8x8xf32> to vector<64x8xf32>
    %12 = vector.extract_strided_slice %5 {offsets = [1, 0, 0], sizes = [8, 8, 8], strides = [1, 1, 1]} : vector<10x10x8xf32> to vector<8x8x8xf32>
    %13 = vector.shape_cast %12 : vector<8x8x8xf32> to vector<64x8xf32>
    %14 = vector.extract_strided_slice %5 {offsets = [1, 1, 0], sizes = [8, 8, 8], strides = [1, 1, 1]} : vector<10x10x8xf32> to vector<8x8x8xf32>
    %15 = vector.shape_cast %14 : vector<8x8x8xf32> to vector<64x8xf32>
    %16 = vector.extract_strided_slice %5 {offsets = [1, 2, 0], sizes = [8, 8, 8], strides = [1, 1, 1]} : vector<10x10x8xf32> to vector<8x8x8xf32>
    %17 = vector.shape_cast %16 : vector<8x8x8xf32> to vector<64x8xf32>
    %18 = vector.extract_strided_slice %5 {offsets = [2, 0, 0], sizes = [8, 8, 8], strides = [1, 1, 1]} : vector<10x10x8xf32> to vector<8x8x8xf32>
    %19 = vector.shape_cast %18 : vector<8x8x8xf32> to vector<64x8xf32>
    %20 = vector.extract_strided_slice %5 {offsets = [2, 1, 0], sizes = [8, 8, 8], strides = [1, 1, 1]} : vector<10x10x8xf32> to vector<8x8x8xf32>
    %21 = vector.shape_cast %20 : vector<8x8x8xf32> to vector<64x8xf32>
    %22 = vector.extract_strided_slice %5 {offsets = [2, 2, 0], sizes = [8, 8, 8], strides = [1, 1, 1]} : vector<10x10x8xf32> to vector<8x8x8xf32>
    %23 = vector.shape_cast %22 : vector<8x8x8xf32> to vector<64x8xf32>
    %24 = tpu.concatenate %7, %9, %11, %13, %15, %17, %19, %21, %23 in 1 : vector<64x8xf32>, vector<64x8xf32>, vector<64x8xf32>, vector<64x8xf32>, vector<64x8xf32>, vector<64x8xf32>, vector<64x8xf32>, vector<64x8xf32>, vector<64x8xf32> -> vector<64x72xf32>
    %c0_11 = arith.constant 0 : index
    %c0_12 = arith.constant 0 : index
    %25 = vector.load %arg3[%c0_11, %c0_12] : memref<72x32xf32, #tpu.memory_space<vmem>>, vector<72x32xf32>
    %cst_13 = arith.constant dense<0.000000e+00> : vector<64x32xf32>
    %26 = tpu.matmul %24, %25, %cst_13 {dimension_numbers = #tpu.dot_dimension_numbers<[1], [0], [0], [1], [0, 0, 1, 1], [], []>} : vector<64x72xf32>, vector<72x32xf32>, vector<64x32xf32> -> vector<64x32xf32>
    %c0_14 = arith.constant 0 : index
    %c0_15 = arith.constant 0 : index
    %27 = vector.load %arg4[%c0_14, %c0_15] : memref<1x32xf32, #tpu.memory_space<vmem>>, vector<1x32xf32>
    %28 = vector.broadcast %27 : vector<1x32xf32> to vector<64x32xf32>
    %29 = arith.addf %26, %28 : vector<64x32xf32>
    %cst_16 = arith.constant 0.000000e+00 : f32
    %30 = vector.broadcast %cst_16 : f32 to vector<64x32xf32>
    %31 = arith.maximumf %29, %30 : vector<64x32xf32>
    %c0_17 = arith.constant 0 : index
    %c0_18 = arith.constant 0 : index
    %c0_19 = arith.constant 0 : index
    %32 = vector.load %arg2[%c0_17, %c0_18, %c0_19] : memref<1x64x32xf32, #tpu.memory_space<vmem>>, vector<1x64x32xf32>
    %33 = vector.shape_cast %32 : vector<1x64x32xf32> to vector<64x32xf32>
    %34 = arith.addf %31, %33 : vector<64x32xf32>
    %c0_20 = arith.constant 0 : index
    %c0_21 = arith.constant 0 : index
    %35 = vector.load %arg5[%c0_20, %c0_21] : memref<32x8xf32, #tpu.memory_space<vmem>>, vector<32x8xf32>
    %cst_22 = arith.constant dense<0.000000e+00> : vector<64x8xf32>
    %36 = tpu.matmul %34, %35, %cst_22 {dimension_numbers = #tpu.dot_dimension_numbers<[1], [0], [0], [1], [0, 0, 1, 1], [], []>} : vector<64x32xf32>, vector<32x8xf32>, vector<64x8xf32> -> vector<64x8xf32>
    %c0_23 = arith.constant 0 : index
    %c0_24 = arith.constant 0 : index
    %37 = vector.load %arg6[%c0_23, %c0_24] : memref<1x8xf32, #tpu.memory_space<vmem>>, vector<1x8xf32>
    %38 = vector.broadcast %37 : vector<1x8xf32> to vector<64x8xf32>
    %39 = arith.addf %36, %38 : vector<64x8xf32>
    %cst_25 = arith.constant 0.000000e+00 : f32
    %40 = vector.broadcast %cst_25 : f32 to vector<64x8xf32>
    %41 = arith.maximumf %39, %40 : vector<64x8xf32>
    %c0_26 = arith.constant 0 : index
    %c0_27 = arith.constant 0 : index
    %42 = vector.load %arg7[%c0_26, %c0_27] : memref<8x32xf32, #tpu.memory_space<vmem>>, vector<8x32xf32>
    %cst_28 = arith.constant dense<0.000000e+00> : vector<64x32xf32>
    %43 = tpu.matmul %41, %42, %cst_28 {dimension_numbers = #tpu.dot_dimension_numbers<[1], [0], [0], [1], [0, 0, 1, 1], [], []>} : vector<64x8xf32>, vector<8x32xf32>, vector<64x32xf32> -> vector<64x32xf32>
    %c0_29 = arith.constant 0 : index
    %c0_30 = arith.constant 0 : index
    %44 = vector.load %arg8[%c0_29, %c0_30] : memref<1x32xf32, #tpu.memory_space<vmem>>, vector<1x32xf32>
    %45 = vector.broadcast %44 : vector<1x32xf32> to vector<64x32xf32>
    %46 = arith.addf %43, %45 : vector<64x32xf32>
    %cst_31 = arith.constant dense<0.000000e+00> : vector<32xf32>
    %47 = vector.multi_reduction <add>, %34, %cst_31 [0] : vector<64x32xf32> to vector<32xf32>
    %48 = vector.shape_cast %47 : vector<32xf32> to vector<1x32xf32>
    %cst_32 = arith.constant 6.400000e+01 : f32
    %49 = vector.broadcast %cst_32 : f32 to vector<1x32xf32>
    %50 = arith.divf %48, %49 : vector<1x32xf32>
    %c0_33 = arith.constant 0 : index
    %c0_34 = arith.constant 0 : index
    %51 = vector.load %arg9[%c0_33, %c0_34] : memref<32x2xf32, #tpu.memory_space<vmem>>, vector<32x2xf32>
    %cst_35 = arith.constant dense<0.000000e+00> : vector<1x2xf32>
    %52 = tpu.matmul %50, %51, %cst_35 {dimension_numbers = #tpu.dot_dimension_numbers<[1], [0], [0], [1], [0, 0, 1, 1], [], []>} : vector<1x32xf32>, vector<32x2xf32>, vector<1x2xf32> -> vector<1x2xf32>
    %c0_36 = arith.constant 0 : index
    %c0_37 = arith.constant 0 : index
    %53 = vector.load %arg10[%c0_36, %c0_37] : memref<1x2xf32, #tpu.memory_space<vmem>>, vector<1x2xf32>
    %54 = arith.addf %52, %53 : vector<1x2xf32>
    %cst_38 = arith.constant 0.000000e+00 : f32
    %55 = vector.broadcast %cst_38 : f32 to vector<1x2xf32>
    %56 = arith.maximumf %54, %55 : vector<1x2xf32>
    %c0_39 = arith.constant 0 : index
    %c0_40 = arith.constant 0 : index
    %57 = vector.load %arg11[%c0_39, %c0_40] : memref<2x32xf32, #tpu.memory_space<vmem>>, vector<2x32xf32>
    %cst_41 = arith.constant dense<0.000000e+00> : vector<1x32xf32>
    %58 = tpu.matmul %56, %57, %cst_41 {dimension_numbers = #tpu.dot_dimension_numbers<[1], [0], [0], [1], [0, 0, 1, 1], [], []>} : vector<1x2xf32>, vector<2x32xf32>, vector<1x32xf32> -> vector<1x32xf32>
    %c0_42 = arith.constant 0 : index
    %c0_43 = arith.constant 0 : index
    %59 = vector.load %arg12[%c0_42, %c0_43] : memref<1x32xf32, #tpu.memory_space<vmem>>, vector<1x32xf32>
    %60 = arith.addf %58, %59 : vector<1x32xf32>
    %61 = vector.broadcast %60 : vector<1x32xf32> to vector<64x32xf32>
    %62 = arith.addf %46, %61 : vector<64x32xf32>
    %63 = arith.negf %62 : vector<64x32xf32>
    %64 = math.exp %63 : vector<64x32xf32>
    %cst_44 = arith.constant 1.000000e+00 : f32
    %65 = vector.broadcast %cst_44 : f32 to vector<64x32xf32>
    %66 = arith.addf %65, %64 : vector<64x32xf32>
    %67 = arith.divf %65, %66 : vector<64x32xf32>
    %cst_45 = arith.constant 2.000000e+00 : f32
    %68 = vector.broadcast %cst_45 : f32 to vector<64x32xf32>
    %69 = arith.mulf %68, %31 : vector<64x32xf32>
    %70 = arith.mulf %69, %67 : vector<64x32xf32>
    %cst_46 = arith.constant 2.000000e+00 : f32
    %71 = vector.broadcast %cst_46 : f32 to vector<64x32xf32>
    %72 = arith.mulf %71, %33 : vector<64x32xf32>
    %cst_47 = arith.constant 1.000000e+00 : f32
    %73 = vector.broadcast %cst_47 : f32 to vector<64x32xf32>
    %74 = arith.subf %73, %67 : vector<64x32xf32>
    %75 = arith.mulf %72, %74 : vector<64x32xf32>
    %76 = arith.addf %70, %75 : vector<64x32xf32>
    %c0_48 = arith.constant 0 : index
    %c0_49 = arith.constant 0 : index
    %c0_50 = arith.constant 0 : index
    %77 = vector.load %arg13[%c0_48, %c0_49, %c0_50] : memref<1x64x32xf32, #tpu.memory_space<vmem>>, vector<1x64x32xf32>
    %78 = vector.shape_cast %77 : vector<1x64x32xf32> to vector<64x32xf32>
    %79 = vector.shape_cast %76 : vector<64x32xf32> to vector<1x64x32xf32>
    tpu.vector_store %arg13[%c0_48, %c0_49, %c0_50], %79 {strides = array<i32>} : memref<1x64x32xf32, #tpu.memory_space<vmem>>, vector<1x64x32xf32>,
    return
  }
  func.func @transform_0(%arg0: i32) -> (i32, i32, i32, i32) {
    %c0_i32 = arith.constant 0 : i32
    %c0_i32_0 = arith.constant 0 : i32
    %c0_i32_1 = arith.constant 0 : i32
    %c0_i32_2 = arith.constant 0 : i32
    return %arg0, %c0_i32, %c0_i32_0, %c0_i32_1 : i32, i32, i32, i32
  }
  func.func @transform_1(%arg0: i32) -> (i32, i32, i32) {
    %c0_i32 = arith.constant 0 : i32
    %c0_i32_0 = arith.constant 0 : i32
    %c0_i32_1 = arith.constant 0 : i32
    return %arg0, %c0_i32, %c0_i32_0 : i32, i32, i32
  }
  func.func @transform_2(%arg0: i32) -> (i32, i32) {
    %c0_i32 = arith.constant 0 : i32
    %c0_i32_0 = arith.constant 0 : i32
    %c0_i32_1 = arith.constant 0 : i32
    return %c0_i32, %c0_i32_0 : i32, i32
  }
  func.func @transform_3(%arg0: i32) -> (i32, i32) {
    %c0_i32 = arith.constant 0 : i32
    %c0_i32_0 = arith.constant 0 : i32
    %c0_i32_1 = arith.constant 0 : i32
    return %c0_i32, %c0_i32_0 : i32, i32
  }
  func.func @transform_4(%arg0: i32) -> (i32, i32) {
    %c0_i32 = arith.constant 0 : i32
    %c0_i32_0 = arith.constant 0 : i32
    %c0_i32_1 = arith.constant 0 : i32
    return %c0_i32, %c0_i32_0 : i32, i32
  }
  func.func @transform_5(%arg0: i32) -> (i32, i32) {
    %c0_i32 = arith.constant 0 : i32
    %c0_i32_0 = arith.constant 0 : i32
    %c0_i32_1 = arith.constant 0 : i32
    return %c0_i32, %c0_i32_0 : i32, i32
  }
  func.func @transform_6(%arg0: i32) -> (i32, i32) {
    %c0_i32 = arith.constant 0 : i32
    %c0_i32_0 = arith.constant 0 : i32
    %c0_i32_1 = arith.constant 0 : i32
    return %c0_i32, %c0_i32_0 : i32, i32
  }
  func.func @transform_7(%arg0: i32) -> (i32, i32) {
    %c0_i32 = arith.constant 0 : i32
    %c0_i32_0 = arith.constant 0 : i32
    %c0_i32_1 = arith.constant 0 : i32
    return %c0_i32, %c0_i32_0 : i32, i32
  }
  func.func @transform_8(%arg0: i32) -> (i32, i32) {
    %c0_i32 = arith.constant 0 : i32
    %c0_i32_0 = arith.constant 0 : i32
    %c0_i32_1 = arith.constant 0 : i32
    return %c0_i32, %c0_i32_0 : i32, i32
  }
  func.func @transform_9(%arg0: i32) -> (i32, i32) {
    %c0_i32 = arith.constant 0 : i32
    %c0_i32_0 = arith.constant 0 : i32
    %c0_i32_1 = arith.constant 0 : i32
    return %c0_i32, %c0_i32_0 : i32, i32
  }
  func.func @transform_10(%arg0: i32) -> (i32, i32) {
    %c0_i32 = arith.constant 0 : i32
    %c0_i32_0 = arith.constant 0 : i32
    %c0_i32_1 = arith.constant 0 : i32
    return %c0_i32, %c0_i32_0 : i32, i32
  }
  func.func @transform_11(%arg0: i32) -> (i32, i32) {
    %c0_i32 = arith.constant 0 : i32
    %c0_i32_0 = arith.constant 0 : i32
    %c0_i32_1 = arith.constant 0 : i32
    return %c0_i32, %c0_i32_0 : i32, i32
  }
  func.func @transform_12(%arg0: i32) -> (i32, i32, i32) {
    %c0_i32 = arith.constant 0 : i32
    %c0_i32_0 = arith.constant 0 : i32
    %c0_i32_1 = arith.constant 0 : i32
    return %arg0, %c0_i32, %c0_i32_0 : i32, i32, i32
  }
}

</mosaic_0001>

<llo_original>
// kernel: tpu_custom_call.1
$region0: #{tpu_custom_call.1}
  #allocation0 [shape = 'u32[]', space=smem, size = 0x4, offset = 0x4, fixed_abs, tag = 'smem constant byte address 0x4 - core index']
  #allocation1 [shape = 'u32[144,128]{1,0:T(1,128)}', space=vmem, size = 0x12000, scoped, tag = 'internal scratch']
  #allocation2 [shape = 'f32[10,10,8]{2,1,0:T(8,128)}', space=vmem, size = 0x14000, scoped, tag = 'scratch operand']
  %s0 = inlined_call_operand.vmem [shape: f32[2,8,8,8], index: 0, kind: input, shape index: {}]
  %s1 = inlined_call_operand.vmem [shape: f32[2,64,32], index: 1, kind: input, shape index: {}]
  %s2 = inlined_call_operand.vmem [shape: f32[72,32], index: 2, kind: input, shape index: {}]
  %s3 = inlined_call_operand.vmem [shape: f32[1,32], index: 3, kind: input, shape index: {}]
  %s4 = inlined_call_operand.vmem [shape: f32[32,8], index: 4, kind: input, shape index: {}]
  %s5 = inlined_call_operand.vmem [shape: f32[1,8], index: 5, kind: input, shape index: {}]
  %s6 = inlined_call_operand.vmem [shape: f32[8,32], index: 6, kind: input, shape index: {}]
  %s7 = inlined_call_operand.vmem [shape: f32[1,32], index: 7, kind: input, shape index: {}]
  %s8 = inlined_call_operand.vmem [shape: f32[32,2], index: 8, kind: input, shape index: {}]
  %s9 = inlined_call_operand.vmem [shape: f32[1,2], index: 9, kind: input, shape index: {}]
  %s10 = inlined_call_operand.vmem [shape: f32[2,32], index: 10, kind: input, shape index: {}]
  %s11 = inlined_call_operand.vmem [shape: f32[1,32], index: 11, kind: input, shape index: {}]
  %s12 = inlined_call_operand.vmem [shape: f32[2,64,32], index: 12, kind: output, shape index: {}]
  %s13 = sld [smem:[#allocation0]]
  $region81: #{tpu_custom_call.1} parent=0
    _
  %s15 = ssub.s32 1, %s13
  %s16 = scalar_select 0, %s15, %s13
  loop: start=0, step=1, limit=4
  $region2: #{tpu_custom_call.1} parent=0 // loop_pre_header
    _
  $region3: #{tpu_custom_call.1} parent=0 // loop_header
    %s18 = sphi 0, %s22
    %p19 = scmp.ge.s32.totalorder %s18, 4
    %s28 = sphi 0, %s30
    %s31 = sphi 0, %s28
    %s32 = sphi 0, %s31
    %s48 = sphi 0, %s32
    %s54 = sphi 0, %s56
    %s57 = sphi 0, %s54
    %s58 = sphi 0, %s57
    %s74 = sphi 0, %s58
    %s78 = sphi 0, %s78
    %s80 = sphi 0, %s78
    %s81 = sphi 0, %s80
    %s95 = sphi 0, %s81
    %s99 = sphi 0, %s99
    %s101 = sphi 0, %s99
    %s102 = sphi 0, %s101
    %s116 = sphi 0, %s102
    %s120 = sphi 0, %s120
    %s122 = sphi 0, %s120
    %s123 = sphi 0, %s122
    %s137 = sphi 0, %s123
    %s141 = sphi 0, %s141
    %s143 = sphi 0, %s141
    %s144 = sphi 0, %s143
    %s158 = sphi 0, %s144
    %s162 = sphi 0, %s162
    %s164 = sphi 0, %s162
    %s165 = sphi 0, %s164
    %s179 = sphi 0, %s165
    %s183 = sphi 0, %s183
    %s185 = sphi 0, %s183
    %s186 = sphi 0, %s185
    %s200 = sphi 0, %s186
    %s204 = sphi 0, %s204
    %s206 = sphi 0, %s204
    %s207 = sphi 0, %s206
    %s221 = sphi 0, %s207
    %s225 = sphi 0, %s225
    %s227 = sphi 0, %s225
    %s228 = sphi 0, %s227
    %s242 = sphi 0, %s228
    %s246 = sphi 0, %s246
    %s248 = sphi 0, %s246
    %s249 = sphi 0, %s248
    %s263 = sphi 0, %s249
    %s267 = sphi 0, %s267
    %s269 = sphi 0, %s267
    %s270 = sphi 0, %s269
    %s284 = sphi 0, %s270
    %s290 = sphi 0, %s292
    %s293 = sphi 0, %s290
    %s294 = sphi 0, %s293
    %s310 = sphi 0, %s294
  $region4: #{tpu_custom_call.1} parent=0 // loop_header_branch
    %21 = sbr.rel (%p19) target = $region8
  $region5: #{tpu_custom_call.1} parent=0 // loop_body
    %s23 = ssub.s32 %s18, 1
    %s24 = ssub.s32 %s18, 2
    %s25 = sadd.s32 %s18, 1
    %s26 = ssub.s32 %s18, %s25
    %p27 = scmp.eq.s32.totalorder %s26, 0
    %s29 = sadd.s32 %s28, 1
    %s30 = scalar_select %p27, %s28, %s29
    %p33 = pneg %p27
    %p34 = scmp.eq.s32.totalorder %s18, 1
    %p35 = por %p33, %p34
    %p36 = scmp.ne.s32.totalorder %s28, %s31
    %p37 = scmp.eq.s32.totalorder %s18, 0
    %p38 = por %p36, %p37
    %p39 = scmp.ne.s32.totalorder %s28, %s31
    %p40 = scmp.eq.s32.totalorder %s23, 1
    %p41 = por %p39, %p40
    %p42 = scmp.ne.s32.totalorder %s31, %s32
    %p43 = scmp.eq.s32.totalorder %s23, 0
    %p44 = por %p42, %p43
    %p45 = scmp.ne.s32.totalorder %s31, %s32
    %p46 = scmp.eq.s32.totalorder %s24, 1
    %p47 = por %p45, %p46
    %p49 = scmp.ne.s32.totalorder %s32, %s48
    %p50 = scmp.eq.s32.totalorder %s24, 0
    %p51 = por %p49, %p50
    %s52 = ssub.s32 %s18, %s25
    %p53 = scmp.eq.s32.totalorder %s52, 0
    %s55 = sadd.s32 %s54, 1
    %s56 = scalar_select %p53, %s54, %s55
    %p59 = pneg %p53
    %p60 = scmp.eq.s32.totalorder %s18, 1
    %p61 = por %p59, %p60
    %p62 = scmp.ne.s32.totalorder %s54, %s57
    %p63 = scmp.eq.s32.totalorder %s18, 0
    %p64 = por %p62, %p63
    %p65 = scmp.ne.s32.totalorder %s54, %s57
    %p66 = scmp.eq.s32.totalorder %s23, 1
    %p67 = por %p65, %p66
    %p68 = scmp.ne.s32.totalorder %s57, %s58
    %p69 = scmp.eq.s32.totalorder %s23, 0
    %p70 = por %p68, %p69
    %p71 = scmp.ne.s32.totalorder %s57, %s58
    %p72 = scmp.eq.s32.totalorder %s24, 1
    %p73 = por %p71, %p72
    %p75 = scmp.ne.s32.totalorder %s58, %s74
    %p76 = scmp.eq.s32.totalorder %s24, 0
    %p77 = por %p75, %p76
    %s79 = sadd.s32 %s78, 1
    %p82 = scmp.eq.s32.totalorder %s18, 1
    %p83 = scmp.ne.s32.totalorder %s78, %s80
    %p84 = scmp.eq.s32.totalorder %s18, 0
    %p85 = por %p83, %p84
    %p86 = scmp.ne.s32.totalorder %s78, %s80
    %p87 = scmp.eq.s32.totalorder %s23, 1
    %p88 = por %p86, %p87
    %p89 = scmp.ne.s32.totalorder %s80, %s81
    %p90 = scmp.eq.s32.totalorder %s23, 0
    %p91 = por %p89, %p90
    %p92 = scmp.ne.s32.totalorder %s80, %s81
    %p93 = scmp.eq.s32.totalorder %s24, 1
    %p94 = por %p92, %p93
    %p96 = scmp.ne.s32.totalorder %s81, %s95
    %p97 = scmp.eq.s32.totalorder %s24, 0
    %p98 = por %p96, %p97
    %s100 = sadd.s32 %s99, 1
    %p103 = scmp.eq.s32.totalorder %s18, 1
    %p104 = scmp.ne.s32.totalorder %s99, %s101
    %p105 = scmp.eq.s32.totalorder %s18, 0
    %p106 = por %p104, %p105
    %p107 = scmp.ne.s32.totalorder %s99, %s101
    %p108 = scmp.eq.s32.totalorder %s23, 1
    %p109 = por %p107, %p108
    %p110 = scmp.ne.s32.totalorder %s101, %s102
    %p111 = scmp.eq.s32.totalorder %s23, 0
    %p112 = por %p110, %p111
    %p113 = scmp.ne.s32.totalorder %s101, %s102
    %p114 = scmp.eq.s32.totalorder %s24, 1
    %p115 = por %p113, %p114
    %p117 = scmp.ne.s32.totalorder %s102, %s116
    %p118 = scmp.eq.s32.totalorder %s24, 0
    %p119 = por %p117, %p118
    %s121 = sadd.s32 %s120, 1
    %p124 = scmp.eq.s32.totalorder %s18, 1
    %p125 = scmp.ne.s32.totalorder %s120, %s122
    %p126 = scmp.eq.s32.totalorder %s18, 0
    %p127 = por %p125, %p126
    %p128 = scmp.ne.s32.totalorder %s120, %s122
    %p129 = scmp.eq.s32.totalorder %s23, 1
    %p130 = por %p128, %p129
    %p131 = scmp.ne.s32.totalorder %s122, %s123
    %p132 = scmp.eq.s32.totalorder %s23, 0
    %p133 = por %p131, %p132
    %p134 = scmp.ne.s32.totalorder %s122, %s123
    %p135 = scmp.eq.s32.totalorder %s24, 1
    %p136 = por %p134, %p135
    %p138 = scmp.ne.s32.totalorder %s123, %s137
    %p139 = scmp.eq.s32.totalorder %s24, 0
    %p140 = por %p138, %p139
    %s142 = sadd.s32 %s141, 1
    %p145 = scmp.eq.s32.totalorder %s18, 1
    %p146 = scmp.ne.s32.totalorder %s141, %s143
    %p147 = scmp.eq.s32.totalorder %s18, 0
    %p148 = por %p146, %p147
    %p149 = scmp.ne.s32.totalorder %s141, %s143
    %p150 = scmp.eq.s32.totalorder %s23, 1
    %p151 = por %p149, %p150
    %p152 = scmp.ne.s32.totalorder %s143, %s144
    %p153 = scmp.eq.s32.totalorder %s23, 0
    %p154 = por %p152, %p153
    %p155 = scmp.ne.s32.totalorder %s143, %s144
    %p156 = scmp.eq.s32.totalorder %s24, 1
    %p157 = por %p155, %p156
    %p159 = scmp.ne.s32.totalorder %s144, %s158
    %p160 = scmp.eq.s32.totalorder %s24, 0
    %p161 = por %p159, %p160
    %s163 = sadd.s32 %s162, 1
    %p166 = scmp.eq.s32.totalorder %s18, 1
    %p167 = scmp.ne.s32.totalorder %s162, %s164
    %p168 = scmp.eq.s32.totalorder %s18, 0
    %p169 = por %p167, %p168
    %p170 = scmp.ne.s32.totalorder %s162, %s164
    %p171 = scmp.eq.s32.totalorder %s23, 1
    %p172 = por %p170, %p171
    %p173 = scmp.ne.s32.totalorder %s164, %s165
    %p174 = scmp.eq.s32.totalorder %s23, 0
    %p175 = por %p173, %p174
    %p176 = scmp.ne.s32.totalorder %s164, %s165
    %p177 = scmp.eq.s32.totalorder %s24, 1
    %p178 = por %p176, %p177
    %p180 = scmp.ne.s32.totalorder %s165, %s179
    %p181 = scmp.eq.s32.totalorder %s24, 0
    %p182 = por %p180, %p181
    %s184 = sadd.s32 %s183, 1
    %p187 = scmp.eq.s32.totalorder %s18, 1
    %p188 = scmp.ne.s32.totalorder %s183, %s185
    %p189 = scmp.eq.s32.totalorder %s18, 0
    %p190 = por %p188, %p189
    %p191 = scmp.ne.s32.totalorder %s183, %s185
    %p192 = scmp.eq.s32.totalorder %s23, 1
    %p193 = por %p191, %p192
    %p194 = scmp.ne.s32.totalorder %s185, %s186
    %p195 = scmp.eq.s32.totalorder %s23, 0
    %p196 = por %p194, %p195
    %p197 = scmp.ne.s32.totalorder %s185, %s186
    %p198 = scmp.eq.s32.totalorder %s24, 1
    %p199 = por %p197, %p198
    %p201 = scmp.ne.s32.totalorder %s186, %s200
    %p202 = scmp.eq.s32.totalorder %s24, 0
    %p203 = por %p201, %p202
    %s205 = sadd.s32 %s204, 1
    %p208 = scmp.eq.s32.totalorder %s18, 1
    %p209 = scmp.ne.s32.totalorder %s204, %s206
    %p210 = scmp.eq.s32.totalorder %s18, 0
    %p211 = por %p209, %p210
    %p212 = scmp.ne.s32.totalorder %s204, %s206
    %p213 = scmp.eq.s32.totalorder %s23, 1
    %p214 = por %p212, %p213
    %p215 = scmp.ne.s32.totalorder %s206, %s207
    %p216 = scmp.eq.s32.totalorder %s23, 0
    %p217 = por %p215, %p216
    %p218 = scmp.ne.s32.totalorder %s206, %s207
    %p219 = scmp.eq.s32.totalorder %s24, 1
    %p220 = por %p218, %p219
    %p222 = scmp.ne.s32.totalorder %s207, %s221
    %p223 = scmp.eq.s32.totalorder %s24, 0
    %p224 = por %p222, %p223
    %s226 = sadd.s32 %s225, 1
    %p229 = scmp.eq.s32.totalorder %s18, 1
    %p230 = scmp.ne.s32.totalorder %s225, %s227
    %p231 = scmp.eq.s32.totalorder %s18, 0
    %p232 = por %p230, %p231
    %p233 = scmp.ne.s32.totalorder %s225, %s227
    %p234 = scmp.eq.s32.totalorder %s23, 1
    %p235 = por %p233, %p234
    %p236 = scmp.ne.s32.totalorder %s227, %s228
    %p237 = scmp.eq.s32.totalorder %s23, 0
    %p238 = por %p236, %p237
    %p239 = scmp.ne.s32.totalorder %s227, %s228
    %p240 = scmp.eq.s32.totalorder %s24, 1
    %p241 = por %p239, %p240
    %p243 = scmp.ne.s32.totalorder %s228, %s242
    %p244 = scmp.eq.s32.totalorder %s24, 0
    %p245 = por %p243, %p244
    %s247 = sadd.s32 %s246, 1
    %p250 = scmp.eq.s32.totalorder %s18, 1
    %p251 = scmp.ne.s32.totalorder %s246, %s248
    %p252 = scmp.eq.s32.totalorder %s18, 0
    %p253 = por %p251, %p252
    %p254 = scmp.ne.s32.totalorder %s246, %s248
    %p255 = scmp.eq.s32.totalorder %s23, 1
    %p256 = por %p254, %p255
    %p257 = scmp.ne.s32.totalorder %s248, %s249
    %p258 = scmp.eq.s32.totalorder %s23, 0
    %p259 = por %p257, %p258
    %p260 = scmp.ne.s32.totalorder %s248, %s249
    %p261 = scmp.eq.s32.totalorder %s24, 1
    %p262 = por %p260, %p261
    %p264 = scmp.ne.s32.totalorder %s249, %s263
    %p265 = scmp.eq.s32.totalorder %s24, 0
    %p266 = por %p264, %p265
    %s268 = sadd.s32 %s267, 1
    %p271 = scmp.eq.s32.totalorder %s18, 1
    %p272 = scmp.ne.s32.totalorder %s267, %s269
    %p273 = scmp.eq.s32.totalorder %s18, 0
    %p274 = por %p272, %p273
    %p275 = scmp.ne.s32.totalorder %s267, %s269
    %p276 = scmp.eq.s32.totalorder %s23, 1
    %p277 = por %p275, %p276
    %p278 = scmp.ne.s32.totalorder %s269, %s270
    %p279 = scmp.eq.s32.totalorder %s23, 0
    %p280 = por %p278, %p279
    %p281 = scmp.ne.s32.totalorder %s269, %s270
    %p282 = scmp.eq.s32.totalorder %s24, 1
    %p283 = por %p281, %p282
    %p285 = scmp.ne.s32.totalorder %s270, %s284
    %p286 = scmp.eq.s32.totalorder %s24, 0
    %p287 = por %p285, %p286
    %s288 = ssub.s32 %s18, %s25
    %p289 = scmp.eq.s32.totalorder %s288, 0
    %s291 = sadd.s32 %s290, 1
    %s292 = scalar_select %p289, %s290, %s291
    %p295 = pneg %p289
    %p296 = scmp.eq.s32.totalorder %s18, 1
    %p297 = por %p295, %p296
    %p298 = scmp.ne.s32.totalorder %s290, %s293
    %p299 = scmp.eq.s32.totalorder %s18, 0
    %p300 = por %p298, %p299
    %p301 = scmp.ne.s32.totalorder %s290, %s293
    %p302 = scmp.eq.s32.totalorder %s23, 1
    %p303 = por %p301, %p302
    %p304 = scmp.ne.s32.totalorder %s293, %s294
    %p305 = scmp.eq.s32.totalorder %s23, 0
    %p306 = por %p304, %p305
    %p307 = scmp.ne.s32.totalorder %s293, %s294
    %p308 = scmp.eq.s32.totalorder %s24, 1
    %p309 = por %p307, %p308
    %p311 = scmp.ne.s32.totalorder %s294, %s310
    %p312 = scmp.eq.s32.totalorder %s24, 0
    %p313 = por %p311, %p312
    %p314 = scmp.le.s32.totalorder 1, %s18
    %p315 = scmp.lt.s32.totalorder %s18, 3
    %p316 = pnand %p314, %p315
    %p317 = pneg %p316
    // Predicated region
    $region9: #{tpu_custom_call.1} parent=5 // pred_check
      _
    $region10: #{tpu_custom_call.1} parent=5 // pred_check_branch
      %319 = sbr.rel (%p316) target = $region12
    $region11: #{tpu_custom_call.1} parent=5 // pred_region
      %s320 = ssub.s32 %s18, 1
      // Predicated region
      $region13: #{tpu_custom_call.1} parent=11 // pred_check
        %p321 = pneg %p91
      $region14: #{tpu_custom_call.1} parent=11 // pred_check_branch
        %323 = sbr.rel (%p321) target = $region16
      $region15: #{tpu_custom_call.1} parent=11 // pred_region
        _
      $region16: #{tpu_custom_call.1} parent=11 // pred_fallthru
        _
      // Predicated region
      $region17: #{tpu_custom_call.1} parent=11 // pred_check
        %p324 = pneg %p112
      $region18: #{tpu_custom_call.1} parent=11 // pred_check_branch
        %326 = sbr.rel (%p324) target = $region20
      $region19: #{tpu_custom_call.1} parent=11 // pred_region
        _
      $region20: #{tpu_custom_call.1} parent=11 // pred_fallthru
        _
      // Predicated region
      $region21: #{tpu_custom_call.1} parent=11 // pred_check
        %p327 = pneg %p133
      $region22: #{tpu_custom_call.1} parent=11 // pred_check_branch
        %329 = sbr.rel (%p327) target = $region24
      $region23: #{tpu_custom_call.1} parent=11 // pred_region
        _
      $region24: #{tpu_custom_call.1} parent=11 // pred_fallthru
        _
      // Predicated region
      $region25: #{tpu_custom_call.1} parent=11 // pred_check
        %p330 = pneg %p154
      $region26: #{tpu_custom_call.1} parent=11 // pred_check_branch
        %332 = sbr.rel (%p330) target = $region28
      $region27: #{tpu_custom_call.1} parent=11 // pred_region
        _
      $region28: #{tpu_custom_call.1} parent=11 // pred_fallthru
        _
      // Predicated region
      $region29: #{tpu_custom_call.1} parent=11 // pred_check
        %p333 = pneg %p175
      $region30: #{tpu_custom_call.1} parent=11 // pred_check_branch
        %335 = sbr.rel (%p333) target = $region32
      $region31: #{tpu_custom_call.1} parent=11 // pred_region
        _
      $region32: #{tpu_custom_call.1} parent=11 // pred_fallthru
        _
      // Predicated region
      $region33: #{tpu_custom_call.1} parent=11 // pred_check
        %p336 = pneg %p196
      $region34: #{tpu_custom_call.1} parent=11 // pred_check_branch
        %338 = sbr.rel (%p336) target = $region36
      $region35: #{tpu_custom_call.1} parent=11 // pred_region
        _
      $region36: #{tpu_custom_call.1} parent=11 // pred_fallthru
        _
      // Predicated region
      $region37: #{tpu_custom_call.1} parent=11 // pred_check
        %p339 = pneg %p217
      $region38: #{tpu_custom_call.1} parent=11 // pred_check_branch
        %341 = sbr.rel (%p339) target = $region40
      $region39: #{tpu_custom_call.1} parent=11 // pred_region
        _
      $region40: #{tpu_custom_call.1} parent=11 // pred_fallthru
        _
      // Predicated region
      $region41: #{tpu_custom_call.1} parent=11 // pred_check
        %p342 = pneg %p238
      $region42: #{tpu_custom_call.1} parent=11 // pred_check_branch
        %344 = sbr.rel (%p342) target = $region44
      $region43: #{tpu_custom_call.1} parent=11 // pred_region
        _
      $region44: #{tpu_custom_call.1} parent=11 // pred_fallthru
        _
      // Predicated region
      $region45: #{tpu_custom_call.1} parent=11 // pred_check
        %p345 = pneg %p259
      $region46: #{tpu_custom_call.1} parent=11 // pred_check_branch
        %347 = sbr.rel (%p345) target = $region48
      $region47: #{tpu_custom_call.1} parent=11 // pred_region
        _
      $region48: #{tpu_custom_call.1} parent=11 // pred_fallthru
        _
      // Predicated region
      $region49: #{tpu_custom_call.1} parent=11 // pred_check
        %p348 = pneg %p280
      $region50: #{tpu_custom_call.1} parent=11 // pred_check_branch
        %350 = sbr.rel (%p348) target = $region52
      $region51: #{tpu_custom_call.1} parent=11 // pred_region
        _
      $region52: #{tpu_custom_call.1} parent=11 // pred_fallthru
        _
    $region12: #{tpu_custom_call.1} parent=5 // pred_fallthru
      _
    %p351 = scmp.lt.s32.totalorder %s18, 2
    // Predicated region
    $region53: #{tpu_custom_call.1} parent=5 // pred_check
      %p352 = pneg %p351
    $region54: #{tpu_custom_call.1} parent=5 // pred_check_branch
      %354 = sbr.rel (%p352) target = $region56
    $region55: #{tpu_custom_call.1} parent=5 // pred_region
      // Predicated region
      $region57: #{tpu_custom_call.1} parent=55 // pred_check
        %p355 = pneg %p38
      $region58: #{tpu_custom_call.1} parent=55 // pred_check_branch
        %357 = sbr.rel (%p355) target = $region60
      $region59: #{tpu_custom_call.1} parent=55 // pred_region
        %p358 = scmp.lt.s32.totalorder %s18, 1
        %s359 = scalar_select %p358, %s18, 1
        %s360 = smul.addr %s359, 8
        %s361 = smul.addr %s360, 8
        %s362 = scalar_lea.vmem %s0, %s361
      $region60: #{tpu_custom_call.1} parent=55 // pred_fallthru
        _
      // Predicated region
      $region61: #{tpu_custom_call.1} parent=55 // pred_check
        %p363 = pneg %p64
      $region62: #{tpu_custom_call.1} parent=55 // pred_check_branch
        %365 = sbr.rel (%p363) target = $region64
      $region63: #{tpu_custom_call.1} parent=55 // pred_region
        %p366 = scmp.lt.s32.totalorder %s18, 1
        %s367 = scalar_select %p366, %s18, 1
        %s368 = smul.addr %s367, 8
        %s369 = smul.addr %s368, 8
        %s370 = scalar_lea.vmem %s1, %s369
      $region64: #{tpu_custom_call.1} parent=55 // pred_fallthru
        _
    $region56: #{tpu_custom_call.1} parent=5 // pred_fallthru
      _
    %p371 = scmp.le.s32.totalorder 1, %s18
    %p372 = scmp.lt.s32.totalorder %s18, 3
    %p373 = pnand %p371, %p372
    %p374 = pneg %p373
    // Predicated region
    $region65: #{tpu_custom_call.1} parent=5 // pred_check
      _
    $region66: #{tpu_custom_call.1} parent=5 // pred_check_branch
      %376 = sbr.rel (%p373) target = $region68
    $region67: #{tpu_custom_call.1} parent=5 // pred_region
      %s377 = ssub.s32 %s18, 1
      %p378 = scmp.lt.s32.totalorder %s23, 1
      %s379 = scalar_select %p378, %s23, 1
      %s380 = smul.addr %s379, 8
      %s381 = smul.addr %s380, 8
      %s382 = scalar_lea.vmem %s0, %s381
      %p383 = pneg %p44
      %p384 = pneg %p41
      %p385 = scmp.lt.s32.totalorder %s23, 1
      %s386 = scalar_select %p385, %s23, 1
      %s387 = smul.addr %s386, 8
      %s388 = smul.addr %s387, 8
      %s389 = scalar_lea.vmem %s1, %s388
      %p390 = pneg %p70
      %p391 = pneg %p67
      %p392 = pneg %p91
      %p393 = pneg %p88
      %p394 = pneg %p112
      %p395 = pneg %p109
      %p396 = pneg %p133
      %p397 = pneg %p130
      %p398 = pneg %p154
      %p399 = pneg %p151
      %p400 = pneg %p175
      %p401 = pneg %p172
      %p402 = pneg %p196
      %p403 = pneg %p193
      %p404 = pneg %p217
      %p405 = pneg %p214
      %p406 = pneg %p238
      %p407 = pneg %p235
      %p408 = pneg %p259
      %p409 = pneg %p256
      %p410 = pneg %p280
      %p411 = pneg %p277
      %p412 = pneg %p306
      %p413 = pneg %p303
      %p414 = scmp.lt.s32.totalorder %s23, 1
      %s415 = scalar_select %p414, %s23, 1
      %s416 = smul.addr %s415, 8
      %s417 = smul.addr %s416, 8
      %s418 = scalar_lea.vmem %s12, %s417
      %p419 = scmp.lt.s32.totalorder %s23, 1
      %s420 = scalar_select %p419, %s23, 1
      %s421 = smul.addr %s420, 8
      %s422 = smul.addr %s421, 8
      %s423 = scalar_lea.vmem %s0, %s422
      %p424 = scmp.lt.s32.totalorder %s23, 1
      %s425 = scalar_select %p424, %s23, 1
      %s426 = smul.addr %s425, 8
      %s427 = smul.addr %s426, 8
      %s428 = scalar_lea.vmem %s1, %s427
      %p429 = scmp.lt.s32.totalorder %s23, 1
      %s430 = scalar_select %p429, %s23, 1
      %s431 = smul.addr %s430, 8
      %s432 = smul.addr %s431, 8
      %s433 = scalar_lea.vmem %s12, %s432
      %vm434 = vcmask 64512
      %435 = vst.msk [vmem:[#allocation2] sm:$0xff] %vm434, 0.0
      %vm436 = vcmask 58368
      %437 = vst.msk [vmem:[#allocation2 + $0x8] sm:$0x3] %vm436, 0.0
      %438 = vst.msk [vmem:[#allocation2 + $0x10] sm:$0xff] %vm434, 0.0
      %439 = vst.msk [vmem:[#allocation2 + $0x18] sm:$0x3] %vm436, 0.0
      %440 = vst.msk [vmem:[#allocation2 + $0x20] sm:$0xff] %vm434, 0.0
      %441 = vst.msk [vmem:[#allocation2 + $0x28] sm:$0x3] %vm436, 0.0
      %442 = vst.msk [vmem:[#allocation2 + $0x30] sm:$0xff] %vm434, 0.0
      %443 = vst.msk [vmem:[#allocation2 + $0x38] sm:$0x3] %vm436, 0.0
      %444 = vst.msk [vmem:[#allocation2 + $0x40] sm:$0xff] %vm434, 0.0
      %445 = vst.msk [vmem:[#allocation2 + $0x48] sm:$0x3] %vm436, 0.0
      %446 = vst.msk [vmem:[#allocation2 + $0x50] sm:$0xff] %vm434, 0.0
      %447 = vst.msk [vmem:[#allocation2 + $0x58] sm:$0x3] %vm436, 0.0
      %448 = vst.msk [vmem:[#allocation2 + $0x60] sm:$0xff] %vm434, 0.0
      %449 = vst.msk [vmem:[#allocation2 + $0x68] sm:$0x3] %vm436, 0.0
      %450 = vst.msk [vmem:[#allocation2 + $0x70] sm:$0xff] %vm434, 0.0
      %451 = vst.msk [vmem:[#allocation2 + $0x78] sm:$0x3] %vm436, 0.0
      %452 = vst.msk [vmem:[#allocation2 + $0x80] sm:$0xff] %vm434, 0.0
      %453 = vst.msk [vmem:[#allocation2 + $0x88] sm:$0x3] %vm436, 0.0
      %454 = vst.msk [vmem:[#allocation2 + $0x90] sm:$0xff] %vm434, 0.0
      %455 = vst.msk [vmem:[#allocation2 + $0x98] sm:$0x3] %vm436, 0.0
      %v456 = vld [vmem:[%s423] sm:$0xff]
      %v457 = vld [vmem:[%s423 + $0x8] sm:$0xff]
      %v458 = vld [vmem:[%s423 + $0x10] sm:$0xff]
      %v459 = vld [vmem:[%s423 + $0x18] sm:$0xff]
      %v460 = vld [vmem:[%s423 + $0x20] sm:$0xff]
      %v461 = vld [vmem:[%s423 + $0x28] sm:$0xff]
      %v462 = vld [vmem:[%s423 + $0x30] sm:$0xff]
      %v463 = vld [vmem:[%s423 + $0x38] sm:$0xff]
      %s464 = scalar_lea.vmem [#allocation2], 16
      %465 = vst.msk [vmem:[%s464 + $0x1] sm:$0xff] %vm434, %v456
      %466 = vst.msk [vmem:[%s464 + $0x11] sm:$0xff] %vm434, %v457
      %467 = vst.msk [vmem:[%s464 + $0x21] sm:$0xff] %vm434, %v458
      %468 = vst.msk [vmem:[%s464 + $0x31] sm:$0xff] %vm434, %v459
      %469 = vst.msk [vmem:[%s464 + $0x41] sm:$0xff] %vm434, %v460
      %470 = vst.msk [vmem:[%s464 + $0x51] sm:$0xff] %vm434, %v461
      %471 = vst.msk [vmem:[%s464 + $0x61] sm:$0xff] %vm434, %v462
      %472 = vst.msk [vmem:[%s464 + $0x71] sm:$0xff] %vm434, %v463
      %v473 = vld [vmem:[#allocation2] sm:$0xff]
      %v474 = vld [vmem:[#allocation2 + $0x8] sm:$0x3]
      %v475 = vld [vmem:[#allocation2 + $0x10] sm:$0xff]
      %v476 = vld [vmem:[#allocation2 + $0x18] sm:$0x3]
      %v477 = vld [vmem:[#allocation2 + $0x20] sm:$0xff]
      %v478 = vld [vmem:[#allocation2 + $0x28] sm:$0x3]
      %v479 = vld [vmem:[#allocation2 + $0x30] sm:$0xff]
      %v480 = vld [vmem:[#allocation2 + $0x38] sm:$0x3]
      %v481 = vld [vmem:[#allocation2 + $0x40] sm:$0xff]
      %v482 = vld [vmem:[#allocation2 + $0x48] sm:$0x3]
      %v483 = vld [vmem:[#allocation2 + $0x50] sm:$0xff]
      %v484 = vld [vmem:[#allocation2 + $0x58] sm:$0x3]
      %v485 = vld [vmem:[#allocation2 + $0x60] sm:$0xff]
      %v486 = vld [vmem:[#allocation2 + $0x68] sm:$0x3]
      %v487 = vld [vmem:[#allocation2 + $0x70] sm:$0xff]
      %v488 = vld [vmem:[#allocation2 + $0x78] sm:$0x3]
      %v489 = vld [vmem:[#allocation2 + $0x80] sm:$0xff]
      %v490 = vld [vmem:[#allocation2 + $0x88] sm:$0x3]
      %v491 = vld [vmem:[#allocation2 + $0x90] sm:$0xff]
      %v492 = vld [vmem:[#allocation2 + $0x98] sm:$0x3]
      %vm509 = vcmask 1046528
      %v510 = vrot.slane %v473, 1
      %v511 = vrot.slane %v474, 1
      %v512 = vsel %vm509, %v510, %v511
      %v513 = vrot.slane %v475, 1
      %v514 = vrot.slane %v476, 1
      %v515 = vsel %vm509, %v513, %v514
      %v516 = vrot.slane %v477, 1
      %v517 = vrot.slane %v478, 1
      %v518 = vsel %vm509, %v516, %v517
      %v519 = vrot.slane %v479, 1
      %v520 = vrot.slane %v480, 1
      %v521 = vsel %vm509, %v519, %v520
      %v522 = vrot.slane %v481, 1
      %v523 = vrot.slane %v482, 1
      %v524 = vsel %vm509, %v522, %v523
      %v525 = vrot.slane %v483, 1
      %v526 = vrot.slane %v484, 1
      %v527 = vsel %vm509, %v525, %v526
      %v528 = vrot.slane %v485, 1
      %v529 = vrot.slane %v486, 1
      %v530 = vsel %vm509, %v528, %v529
      %v531 = vrot.slane %v487, 1
      %v532 = vrot.slane %v488, 1
      %v533 = vsel %vm509, %v531, %v532
      %vm534 = vcmask 1045504
      %v535 = vrot.slane %v473, 2
      %v536 = vrot.slane %v474, 2
      %v537 = vsel %vm534, %v535, %v536
      %v538 = vrot.slane %v475, 2
      %v539 = vrot.slane %v476, 2
      %v540 = vsel %vm534, %v538, %v539
      %v541 = vrot.slane %v477, 2
      %v542 = vrot.slane %v478, 2
      %v543 = vsel %vm534, %v541, %v542
      %v544 = vrot.slane %v479, 2
      %v545 = vrot.slane %v480, 2
      %v546 = vsel %vm534, %v544, %v545
      %v547 = vrot.slane %v481, 2
      %v548 = vrot.slane %v482, 2
      %v549 = vsel %vm534, %v547, %v548
      %v550 = vrot.slane %v483, 2
      %v551 = vrot.slane %v484, 2
      %v552 = vsel %vm534, %v550, %v551
      %v553 = vrot.slane %v485, 2
      %v554 = vrot.slane %v486, 2
      %v555 = vsel %vm534, %v553, %v554
      %v556 = vrot.slane %v487, 2
      %v557 = vrot.slane %v488, 2
      %v558 = vsel %vm534, %v556, %v557
      %v561 = vrot.slane %v489, 1
      %v562 = vrot.slane %v490, 1
      %v563 = vsel %vm509, %v561, %v562
      %v564 = vrot.slane %v489, 2
      %v565 = vrot.slane %v490, 2
      %v566 = vsel %vm534, %v564, %v565
      %v569 = vrot.slane %v491, 1
      %v570 = vrot.slane %v492, 1
      %v571 = vsel %vm509, %v569, %v570
      %v572 = vrot.slane %v491, 2
      %v573 = vrot.slane %v492, 2
      %v574 = vsel %vm534, %v572, %v573
      %575 = vrot.lane.b32.xlu0 %v512, 8
      %v576 = vpop.permute.xlu0 %575
      %577 = vrot.lane.b32.xlu0 %v515, 8
      %v578 = vpop.permute.xlu0 %577
      %579 = vrot.lane.b32.xlu0 %v518, 8
      %v580 = vpop.permute.xlu0 %579
      %581 = vrot.lane.b32.xlu0 %v521, 8
      %v582 = vpop.permute.xlu0 %581
      %583 = vrot.lane.b32.xlu0 %v524, 8
      %v584 = vpop.permute.xlu0 %583
      %585 = vrot.lane.b32.xlu0 %v527, 8
      %v586 = vpop.permute.xlu0 %585
      %587 = vrot.lane.b32.xlu0 %v530, 8
      %v588 = vpop.permute.xlu0 %587
      %589 = vrot.lane.b32.xlu0 %v533, 8
      %v590 = vpop.permute.xlu0 %589
      %599 = vrot.lane.b32.xlu0 %v537, 16
      %v600 = vpop.permute.xlu0 %599
      %601 = vrot.lane.b32.xlu0 %v540, 16
      %v602 = vpop.permute.xlu0 %601
      %603 = vrot.lane.b32.xlu0 %v543, 16
      %v604 = vpop.permute.xlu0 %603
      %605 = vrot.lane.b32.xlu0 %v546, 16
      %v606 = vpop.permute.xlu0 %605
      %607 = vrot.lane.b32.xlu0 %v549, 16
      %v608 = vpop.permute.xlu0 %607
      %609 = vrot.lane.b32.xlu0 %v552, 16
      %v610 = vpop.permute.xlu0 %609
      %611 = vrot.lane.b32.xlu0 %v555, 16
      %v612 = vpop.permute.xlu0 %611
      %613 = vrot.lane.b32.xlu0 %v558, 16
      %v614 = vpop.permute.xlu0 %613
      %623 = vrot.lane.b32.xlu0 %v475, 24
      %v624 = vpop.permute.xlu0 %623
      %625 = vrot.lane.b32.xlu0 %v477, 24
      %v626 = vpop.permute.xlu0 %625
      %627 = vrot.lane.b32.xlu0 %v479, 24
      %v628 = vpop.permute.xlu0 %627
      %629 = vrot.lane.b32.xlu0 %v481, 24
      %v630 = vpop.permute.xlu0 %629
      %631 = vrot.lane.b32.xlu0 %v483, 24
      %v632 = vpop.permute.xlu0 %631
      %633 = vrot.lane.b32.xlu0 %v485, 24
      %v634 = vpop.permute.xlu0 %633
      %635 = vrot.lane.b32.xlu0 %v487, 24
      %v636 = vpop.permute.xlu0 %635
      %637 = vrot.lane.b32.xlu0 %v489, 24
      %v638 = vpop.permute.xlu0 %637
      %647 = vrot.lane.b32.xlu0 %v515, 32
      %v648 = vpop.permute.xlu0 %647
      %649 = vrot.lane.b32.xlu0 %v518, 32
      %v650 = vpop.permute.xlu0 %649
      %651 = vrot.lane.b32.xlu0 %v521, 32
      %v652 = vpop.permute.xlu0 %651
      %653 = vrot.lane.b32.xlu0 %v524, 32
      %v654 = vpop.permute.xlu0 %653
      %655 = vrot.lane.b32.xlu0 %v527, 32
      %v656 = vpop.permute.xlu0 %655
      %657 = vrot.lane.b32.xlu0 %v530, 32
      %v658 = vpop.permute.xlu0 %657
      %659 = vrot.lane.b32.xlu0 %v533, 32
      %v660 = vpop.permute.xlu0 %659
      %661 = vrot.lane.b32.xlu0 %v563, 32
      %v662 = vpop.permute.xlu0 %661
      %671 = vrot.lane.b32.xlu0 %v540, 40
      %v672 = vpop.permute.xlu0 %671
      %673 = vrot.lane.b32.xlu0 %v543, 40
      %v674 = vpop.permute.xlu0 %673
      %675 = vrot.lane.b32.xlu0 %v546, 40
      %v676 = vpop.permute.xlu0 %675
      %677 = vrot.lane.b32.xlu0 %v549, 40
      %v678 = vpop.permute.xlu0 %677
      %679 = vrot.lane.b32.xlu0 %v552, 40
      %v680 = vpop.permute.xlu0 %679
      %681 = vrot.lane.b32.xlu0 %v555, 40
      %v682 = vpop.permute.xlu0 %681
      %683 = vrot.lane.b32.xlu0 %v558, 40
      %v684 = vpop.permute.xlu0 %683
      %685 = vrot.lane.b32.xlu0 %v566, 40
      %v686 = vpop.permute.xlu0 %685
      %695 = vrot.lane.b32.xlu0 %v477, 48
      %v696 = vpop.permute.xlu0 %695
      %697 = vrot.lane.b32.xlu0 %v479, 48
      %v698 = vpop.permute.xlu0 %697
      %699 = vrot.lane.b32.xlu0 %v481, 48
      %v700 = vpop.permute.xlu0 %699
      %701 = vrot.lane.b32.xlu0 %v483, 48
      %v702 = vpop.permute.xlu0 %701
      %703 = vrot.lane.b32.xlu0 %v485, 48
      %v704 = vpop.permute.xlu0 %703
      %705 = vrot.lane.b32.xlu0 %v487, 48
      %v706 = vpop.permute.xlu0 %705
      %707 = vrot.lane.b32.xlu0 %v489, 48
      %v708 = vpop.permute.xlu0 %707
      %709 = vrot.lane.b32.xlu0 %v491, 48
      %v710 = vpop.permute.xlu0 %709
      %719 = vrot.lane.b32.xlu0 %v518, 56
      %v720 = vpop.permute.xlu0 %719
      %721 = vrot.lane.b32.xlu0 %v521, 56
      %v722 = vpop.permute.xlu0 %721
      %723 = vrot.lane.b32.xlu0 %v524, 56
      %v724 = vpop.permute.xlu0 %723
      %725 = vrot.lane.b32.xlu0 %v527, 56
      %v726 = vpop.permute.xlu0 %725
      %727 = vrot.lane.b32.xlu0 %v530, 56
      %v728 = vpop.permute.xlu0 %727
      %729 = vrot.lane.b32.xlu0 %v533, 56
      %v730 = vpop.permute.xlu0 %729
      %731 = vrot.lane.b32.xlu0 %v563, 56
      %v732 = vpop.permute.xlu0 %731
      %733 = vrot.lane.b32.xlu0 %v571, 56
      %v734 = vpop.permute.xlu0 %733
      %743 = vrot.lane.b32.xlu0 %v543, 64
      %v744 = vpop.permute.xlu0 %743
      %745 = vrot.lane.b32.xlu0 %v546, 64
      %v746 = vpop.permute.xlu0 %745
      %747 = vrot.lane.b32.xlu0 %v549, 64
      %v748 = vpop.permute.xlu0 %747
      %749 = vrot.lane.b32.xlu0 %v552, 64
      %v750 = vpop.permute.xlu0 %749
      %751 = vrot.lane.b32.xlu0 %v555, 64
      %v752 = vpop.permute.xlu0 %751
      %753 = vrot.lane.b32.xlu0 %v558, 64
      %v754 = vpop.permute.xlu0 %753
      %755 = vrot.lane.b32.xlu0 %v566, 64
      %v756 = vpop.permute.xlu0 %755
      %757 = vrot.lane.b32.xlu0 %v574, 64
      %v758 = vpop.permute.xlu0 %757
      %v767 = vsel %vm434, %v473, %v576
      %v768 = vsel %vm434, %v475, %v578
      %v769 = vsel %vm434, %v477, %v580
      %v770 = vsel %vm434, %v479, %v582
      %v771 = vsel %vm434, %v481, %v584
      %v772 = vsel %vm434, %v483, %v586
      %v773 = vsel %vm434, %v485, %v588
      %v774 = vsel %vm434, %v487, %v590
      %vm775 = vcmask 130048
      %v776 = vsel %vm775, %v767, %v600
      %v777 = vsel %vm775, %v768, %v602
      %v778 = vsel %vm775, %v769, %v604
      %v779 = vsel %vm775, %v770, %v606
      %v780 = vsel %vm775, %v771, %v608
      %v781 = vsel %vm775, %v772, %v610
      %v782 = vsel %vm775, %v773, %v612
      %v783 = vsel %vm775, %v774, %v614
      %vm784 = vcmask 195584
      %v785 = vsel %vm784, %v776, %v624
      %v786 = vsel %vm784, %v777, %v626
      %v787 = vsel %vm784, %v778, %v628
      %v788 = vsel %vm784, %v779, %v630
      %v789 = vsel %vm784, %v780, %v632
      %v790 = vsel %vm784, %v781, %v634
      %v791 = vsel %vm784, %v782, %v636
      %v792 = vsel %vm784, %v783, %v638
      %vm793 = vcmask 261120
      %v794 = vsel %vm793, %v785, %v648
      %v795 = vsel %vm793, %v786, %v650
      %v796 = vsel %vm793, %v787, %v652
      %v797 = vsel %vm793, %v788, %v654
      %v798 = vsel %vm793, %v789, %v656
      %v799 = vsel %vm793, %v790, %v658
      %v800 = vsel %vm793, %v791, %v660
      %v801 = vsel %vm793, %v792, %v662
      %vm802 = vcmask 326656
      %v803 = vsel %vm802, %v794, %v672
      %v804 = vsel %vm802, %v795, %v674
      %v805 = vsel %vm802, %v796, %v676
      %v806 = vsel %vm802, %v797, %v678
      %v807 = vsel %vm802, %v798, %v680
      %v808 = vsel %vm802, %v799, %v682
      %v809 = vsel %vm802, %v800, %v684
      %v810 = vsel %vm802, %v801, %v686
      %vm811 = vcmask 392192
      %v812 = vsel %vm811, %v803, %v696
      %v813 = vsel %vm811, %v804, %v698
      %v814 = vsel %vm811, %v805, %v700
      %v815 = vsel %vm811, %v806, %v702
      %v816 = vsel %vm811, %v807, %v704
      %v817 = vsel %vm811, %v808, %v706
      %v818 = vsel %vm811, %v809, %v708
      %v819 = vsel %vm811, %v810, %v710
      %vm820 = vcmask 457728
      %v821 = vsel %vm820, %v812, %v720
      %v822 = vsel %vm820, %v813, %v722
      %v823 = vsel %vm820, %v814, %v724
      %v824 = vsel %vm820, %v815, %v726
      %v825 = vsel %vm820, %v816, %v728
      %v826 = vsel %vm820, %v817, %v730
      %v827 = vsel %vm820, %v818, %v732
      %v828 = vsel %vm820, %v819, %v734
      %vm829 = vcmask 523264
      %v830 = vsel %vm829, %v821, %v744
      %v831 = vsel %vm829, %v822, %v746
      %v832 = vsel %vm829, %v823, %v748
      %v833 = vsel %vm829, %v824, %v750
      %v834 = vsel %vm829, %v825, %v752
      %v835 = vsel %vm829, %v826, %v754
      %v836 = vsel %vm829, %v827, %v756
      %v837 = vsel %vm829, %v828, %v758
      %v838 = vld [vmem:[%s2] sm:$0xff]
      %v839 = vld [vmem:[%s2 + $0x8] sm:$0xff]
      %v840 = vld [vmem:[%s2 + $0x10] sm:$0xff]
      %v841 = vld [vmem:[%s2 + $0x18] sm:$0xff]
      %v842 = vld [vmem:[%s2 + $0x20] sm:$0xff]
      %v843 = vld [vmem:[%s2 + $0x28] sm:$0xff]
      %v844 = vld [vmem:[%s2 + $0x30] sm:$0xff]
      %v845 = vld [vmem:[%s2 + $0x38] sm:$0xff]
      %v846 = vld [vmem:[%s2 + $0x40] sm:$0xff]
      %v847 = vld [vmem:[%s3] sm:$0x1]
      %v849 = vlaneseq
      %v850 = vshrl.u32 %v849, 7
      %v851 = vsub.s32 0, %v850
      %v852 = vrot.slane %v847, %v851
      %vm854 = vcmask 588800
      %v856 = vsel %vm854, %v830, 0
      %v859 = vsel %vm854, %v831, 0
      %v862 = vsel %vm854, %v832, 0
      %v865 = vsel %vm854, %v833, 0
      %v868 = vsel %vm854, %v834, 0
      %v871 = vsel %vm854, %v835, 0
      %v874 = vsel %vm854, %v836, 0
      %v877 = vsel %vm854, %v837, 0
      %879 = vmatprep.subr.mxu0 0.0
      %880 = vmatpush1.msra.mxu0 0.0
      %881 = vmatprep.subr.mxu0 0.0
      %882 = vmatpush1.msra.mxu0 0.0
      %883 = vmatprep.subr.mxu0 0.0
      %884 = vmatpush1.msra.mxu0 0.0
      %885 = vmatprep.subr.mxu0 0.0
      %886 = vmatpush1.msra.mxu0 0.0
      %887 = vmatprep.subr.mxu0 0.0
      %888 = vmatpush1.msra.mxu0 0.0
      %889 = vmatprep.subr.mxu0 0.0
      %890 = vmatpush1.msra.mxu0 0.0
      %891 = vmatprep.subr.mxu0 0.0
      %892 = vmatpush1.msra.mxu0 0.0
      %893 = vmatprep.subr.mxu0 0.0
      %894 = vmatpush1.msra.mxu0 %v846
      %895 = vmatprep.subr.mxu0 0.0
      %896 = vmatpush1.msra.mxu0 %v845
      %897 = vmatprep.subr.mxu0 0.0
      %898 = vmatpush1.msra.mxu0 %v844
      %899 = vmatprep.subr.mxu0 0.0
      %900 = vmatpush1.msra.mxu0 %v843
      %901 = vmatprep.subr.mxu0 0.0
      %902 = vmatpush1.msra.mxu0 %v842
      %903 = vmatprep.subr.mxu0 0.0
      %904 = vmatpush1.msra.mxu0 %v841
      %905 = vmatprep.subr.mxu0 0.0
      %906 = vmatpush1.msra.mxu0 %v840
      %907 = vmatprep.subr.mxu0 0.0
      %908 = vmatpush1.msra.mxu0 %v839
      %909 = vmatprep.subr.mxu0 0.0
      %910 = vmatpush1.msra.mxu0 %v838
      %911 = vmatprep.subr.mxu0 0.0
      %912 = vmatpush2.msra.mxu0 0.0
      %913 = vmatprep.subr.mxu0 0.0
      %914 = vmatpush2.msra.mxu0 0.0
      %915 = vmatprep.subr.mxu0 0.0
      %916 = vmatpush2.msra.mxu0 0.0
      %917 = vmatprep.subr.mxu0 0.0
      %918 = vmatpush2.msra.mxu0 0.0
      %919 = vmatprep.subr.mxu0 0.0
      %920 = vmatpush2.msra.mxu0 0.0
      %921 = vmatprep.subr.mxu0 0.0
      %922 = vmatpush2.msra.mxu0 0.0
      %923 = vmatprep.subr.mxu0 0.0
      %924 = vmatpush2.msra.mxu0 0.0
      %925 = vmatprep.subr.mxu0 0.0
      %926 = vmatpush2.msra.mxu0 0.0
      %927 = vmatprep.subr.mxu0 0.0
      %928 = vmatpush2.msra.mxu0 0.0
      %929 = vmatprep.subr.mxu0 0.0
      %930 = vmatpush2.msra.mxu0 0.0
      %931 = vmatprep.subr.mxu0 0.0
      %932 = vmatpush2.msra.mxu0 0.0
      %933 = vmatprep.subr.mxu0 0.0
      %934 = vmatpush2.msra.mxu0 0.0
      %935 = vmatprep.subr.mxu0 0.0
      %936 = vmatpush2.msra.mxu0 0.0
      %937 = vmatprep.subr.mxu0 0.0
      %938 = vmatpush2.msra.mxu0 0.0
      %939 = vmatprep.subr.mxu0 0.0
      %940 = vmatpush2.msra.mxu0 0.0
      %941 = vmatprep.subr.mxu0 0.0
      %942 = vmatpush2.msra.mxu0 0.0
      %943 = vmatprep.mubr.f32.mxu0 0.0
      %944 = vmatmul.mubr.f32.gmra.mxu0 %v856
      %v945 = vpop.f32.mrf.mxu0
      %v946 = vadd.f32 %v852, %v945
      %v947 = vpop.f32.mrf.mxu0
      %948 = vmatprep.mubr.f32.mxu0 0.0
      %949 = vmatmul.mubr.f32.gmra.mxu0 %v859
      %v950 = vpop.f32.mrf.mxu0
      %v951 = vadd.f32 %v852, %v950
      %v952 = vpop.f32.mrf.mxu0
      %953 = vmatprep.mubr.f32.mxu0 0.0
      %954 = vmatmul.mubr.f32.gmra.mxu0 %v862
      %v955 = vpop.f32.mrf.mxu0
      %v956 = vadd.f32 %v852, %v955
      %v957 = vpop.f32.mrf.mxu0
      %958 = vmatprep.mubr.f32.mxu0 0.0
      %959 = vmatmul.mubr.f32.gmra.mxu0 %v865
      %v960 = vpop.f32.mrf.mxu0
      %v961 = vadd.f32 %v852, %v960
      %v962 = vpop.f32.mrf.mxu0
      %963 = vmatprep.mubr.f32.mxu0 0.0
      %964 = vmatmul.mubr.f32.gmra.mxu0 %v868
      %v965 = vpop.f32.mrf.mxu0
      %v966 = vadd.f32 %v852, %v965
      %v967 = vpop.f32.mrf.mxu0
      %968 = vmatprep.mubr.f32.mxu0 0.0
      %969 = vmatmul.mubr.f32.gmra.mxu0 %v871
      %v970 = vpop.f32.mrf.mxu0
      %v971 = vadd.f32 %v852, %v970
      %v972 = vpop.f32.mrf.mxu0
      %973 = vmatprep.mubr.f32.mxu0 0.0
      %974 = vmatmul.mubr.f32.gmra.mxu0 %v874
      %v975 = vpop.f32.mrf.mxu0
      %v976 = vadd.f32 %v852, %v975
      %v977 = vpop.f32.mrf.mxu0
      %978 = vmatprep.mubr.f32.mxu0 0.0
      %979 = vmatmul.mubr.f32.gmra.mxu0 %v877
      %v980 = vpop.f32.mrf.mxu0
      %v981 = vadd.f32 %v852, %v980
      %v982 = vpop.f32.mrf.mxu0
      %983 = vdwg.mxu0
      %v984 = vmax.f32 %v946, 0.0
      %v985 = vmax.f32 %v951, 0.0
      %v986 = vmax.f32 %v956, 0.0
      %v987 = vmax.f32 %v961, 0.0
      %v988 = vmax.f32 %v966, 0.0
      %v989 = vmax.f32 %v971, 0.0
      %v990 = vmax.f32 %v976, 0.0
      %v991 = vmax.f32 %v981, 0.0
      %v992 = vld [vmem:[%s428] sm:$0xff]
      %v993 = vld [vmem:[%s428 + $0x8] sm:$0xff]
      %v994 = vld [vmem:[%s428 + $0x10] sm:$0xff]
      %v995 = vld [vmem:[%s428 + $0x18] sm:$0xff]
      %v996 = vld [vmem:[%s428 + $0x20] sm:$0xff]
      %v997 = vld [vmem:[%s428 + $0x28] sm:$0xff]
      %v998 = vld [vmem:[%s428 + $0x30] sm:$0xff]
      %v999 = vld [vmem:[%s428 + $0x38] sm:$0xff]
      %v1000 = vadd.f32 %v984, %v992
      %v1001 = vadd.f32 %v985, %v993
      %v1002 = vadd.f32 %v986, %v994
      %v1003 = vadd.f32 %v987, %v995
      %v1004 = vadd.f32 %v988, %v996
      %v1005 = vadd.f32 %v989, %v997
      %v1006 = vadd.f32 %v990, %v998
      %v1007 = vadd.f32 %v991, %v999
      %v1008 = vld [vmem:[%s4] sm:$0xff]
      %v1009 = vld [vmem:[%s4 + $0x8] sm:$0xff]
      %v1010 = vld [vmem:[%s4 + $0x10] sm:$0xff]
      %v1011 = vld [vmem:[%s4 + $0x18] sm:$0xff]
      %v1012 = vld [vmem:[%s5] sm:$0x1]
      %v1014 = vlaneseq
      %v1015 = vshrl.u32 %v1014, 7
      %v1016 = vsub.s32 0, %v1015
      %v1017 = vrot.slane %v1012, %v1016
      %v1020 = vsel %vm793, %v1000, 0
      %v1023 = vsel %vm793, %v1001, 0
      %v1026 = vsel %vm793, %v1002, 0
      %v1029 = vsel %vm793, %v1003, 0
      %v1032 = vsel %vm793, %v1004, 0
      %v1035 = vsel %vm793, %v1005, 0
      %v1038 = vsel %vm793, %v1006, 0
      %v1041 = vsel %vm793, %v1007, 0
      %1043 = vmatprep.subr.mxu0 0.0
      %1044 = vmatpush1.msra.mxu0 0.0
      %1045 = vmatprep.subr.mxu0 0.0
      %1046 = vmatpush1.msra.mxu0 0.0
      %1047 = vmatprep.subr.mxu0 0.0
      %1048 = vmatpush1.msra.mxu0 0.0
      %1049 = vmatprep.subr.mxu0 0.0
      %1050 = vmatpush1.msra.mxu0 0.0
      %1051 = vmatprep.subr.mxu0 0.0
      %1052 = vmatpush1.msra.mxu0 0.0
      %1053 = vmatprep.subr.mxu0 0.0
      %1054 = vmatpush1.msra.mxu0 0.0
      %1055 = vmatprep.subr.mxu0 0.0
      %1056 = vmatpush1.msra.mxu0 0.0
      %1057 = vmatprep.subr.mxu0 0.0
      %1058 = vmatpush1.msra.mxu0 0.0
      %1059 = vmatprep.subr.mxu0 0.0
      %1060 = vmatpush1.msra.mxu0 0.0
      %1061 = vmatprep.subr.mxu0 0.0
      %1062 = vmatpush1.msra.mxu0 0.0
      %1063 = vmatprep.subr.mxu0 0.0
      %1064 = vmatpush1.msra.mxu0 0.0
      %1065 = vmatprep.subr.mxu0 0.0
      %1066 = vmatpush1.msra.mxu0 0.0
      %1067 = vmatprep.subr.mxu0 0.0
      %1068 = vmatpush1.msra.mxu0 %v1011
      %1069 = vmatprep.subr.mxu0 0.0
      %1070 = vmatpush1.msra.mxu0 %v1010
      %1071 = vmatprep.subr.mxu0 0.0
      %1072 = vmatpush1.msra.mxu0 %v1009
      %1073 = vmatprep.subr.mxu0 0.0
      %1074 = vmatpush1.msra.mxu0 %v1008
      %1075 = vmatprep.subr.mxu0 0.0
      %1076 = vmatpush2.msra.mxu0 0.0
      %1077 = vmatprep.subr.mxu0 0.0
      %1078 = vmatpush2.msra.mxu0 0.0
      %1079 = vmatprep.subr.mxu0 0.0
      %1080 = vmatpush2.msra.mxu0 0.0
      %1081 = vmatprep.subr.mxu0 0.0
      %1082 = vmatpush2.msra.mxu0 0.0
      %1083 = vmatprep.subr.mxu0 0.0
      %1084 = vmatpush2.msra.mxu0 0.0
      %1085 = vmatprep.subr.mxu0 0.0
      %1086 = vmatpush2.msra.mxu0 0.0
      %1087 = vmatprep.subr.mxu0 0.0
      %1088 = vmatpush2.msra.mxu0 0.0
      %1089 = vmatprep.subr.mxu0 0.0
      %1090 = vmatpush2.msra.mxu0 0.0
      %1091 = vmatprep.subr.mxu0 0.0
      %1092 = vmatpush2.msra.mxu0 0.0
      %1093 = vmatprep.subr.mxu0 0.0
      %1094 = vmatpush2.msra.mxu0 0.0
      %1095 = vmatprep.subr.mxu0 0.0
      %1096 = vmatpush2.msra.mxu0 0.0
      %1097 = vmatprep.subr.mxu0 0.0
      %1098 = vmatpush2.msra.mxu0 0.0
      %1099 = vmatprep.subr.mxu0 0.0
      %1100 = vmatpush2.msra.mxu0 0.0
      %1101 = vmatprep.subr.mxu0 0.0
      %1102 = vmatpush2.msra.mxu0 0.0
      %1103 = vmatprep.subr.mxu0 0.0
      %1104 = vmatpush2.msra.mxu0 0.0
      %1105 = vmatprep.subr.mxu0 0.0
      %1106 = vmatpush2.msra.mxu0 0.0
      %1107 = vmatprep.mubr.f32.mxu0 0.0
      %1108 = vmatmul.mubr.f32.gmra.mxu0 %v1020
      %v1109 = vpop.f32.mrf.mxu0
      %v1110 = vadd.f32 %v1017, %v1109
      %v1111 = vpop.f32.mrf.mxu0
      %1112 = vmatprep.mubr.f32.mxu0 0.0
      %1113 = vmatmul.mubr.f32.gmra.mxu0 %v1023
      %v1114 = vpop.f32.mrf.mxu0
      %v1115 = vadd.f32 %v1017, %v1114
      %v1116 = vpop.f32.mrf.mxu0
      %1117 = vmatprep.mubr.f32.mxu0 0.0
      %1118 = vmatmul.mubr.f32.gmra.mxu0 %v1026
      %v1119 = vpop.f32.mrf.mxu0
      %v1120 = vadd.f32 %v1017, %v1119
      %v1121 = vpop.f32.mrf.mxu0
      %1122 = vmatprep.mubr.f32.mxu0 0.0
      %1123 = vmatmul.mubr.f32.gmra.mxu0 %v1029
      %v1124 = vpop.f32.mrf.mxu0
      %v1125 = vadd.f32 %v1017, %v1124
      %v1126 = vpop.f32.mrf.mxu0
      %1127 = vmatprep.mubr.f32.mxu0 0.0
      %1128 = vmatmul.mubr.f32.gmra.mxu0 %v1032
      %v1129 = vpop.f32.mrf.mxu0
      %v1130 = vadd.f32 %v1017, %v1129
      %v1131 = vpop.f32.mrf.mxu0
      %1132 = vmatprep.mubr.f32.mxu0 0.0
      %1133 = vmatmul.mubr.f32.gmra.mxu0 %v1035
      %v1134 = vpop.f32.mrf.mxu0
      %v1135 = vadd.f32 %v1017, %v1134
      %v1136 = vpop.f32.mrf.mxu0
      %1137 = vmatprep.mubr.f32.mxu0 0.0
      %1138 = vmatmul.mubr.f32.gmra.mxu0 %v1038
      %v1139 = vpop.f32.mrf.mxu0
      %v1140 = vadd.f32 %v1017, %v1139
      %v1141 = vpop.f32.mrf.mxu0
      %1142 = vmatprep.mubr.f32.mxu0 0.0
      %1143 = vmatmul.mubr.f32.gmra.mxu0 %v1041
      %v1144 = vpop.f32.mrf.mxu0
      %v1145 = vadd.f32 %v1017, %v1144
      %v1146 = vpop.f32.mrf.mxu0
      %1147 = vdwg.mxu0
      %v1148 = vmax.f32 %v1110, 0.0
      %v1149 = vmax.f32 %v1115, 0.0
      %v1150 = vmax.f32 %v1120, 0.0
      %v1151 = vmax.f32 %v1125, 0.0
      %v1152 = vmax.f32 %v1130, 0.0
      %v1153 = vmax.f32 %v1135, 0.0
      %v1154 = vmax.f32 %v1140, 0.0
      %v1155 = vmax.f32 %v1145, 0.0
      %v1156 = vld [vmem:[%s6] sm:$0xff]
      %v1157 = vld [vmem:[%s7] sm:$0x1]
      %v1159 = vlaneseq
      %v1160 = vshrl.u32 %v1159, 7
      %v1161 = vsub.s32 0, %v1160
      %v1162 = vrot.slane %v1157, %v1161
      %v1165 = vsel %vm434, %v1148, 0
      %v1168 = vsel %vm434, %v1149, 0
      %v1171 = vsel %vm434, %v1150, 0
      %v1174 = vsel %vm434, %v1151, 0
      %v1177 = vsel %vm434, %v1152, 0
      %v1180 = vsel %vm434, %v1153, 0
      %v1183 = vsel %vm434, %v1154, 0
      %v1186 = vsel %vm434, %v1155, 0
      %1188 = vmatprep.subr.mxu0 0.0
      %1189 = vmatpush1.msra.mxu0 0.0
      %1190 = vmatprep.subr.mxu0 0.0
      %1191 = vmatpush1.msra.mxu0 0.0
      %1192 = vmatprep.subr.mxu0 0.0
      %1193 = vmatpush1.msra.mxu0 0.0
      %1194 = vmatprep.subr.mxu0 0.0
      %1195 = vmatpush1.msra.mxu0 0.0
      %1196 = vmatprep.subr.mxu0 0.0
      %1197 = vmatpush1.msra.mxu0 0.0
      %1198 = vmatprep.subr.mxu0 0.0
      %1199 = vmatpush1.msra.mxu0 0.0
      %1200 = vmatprep.subr.mxu0 0.0
      %1201 = vmatpush1.msra.mxu0 0.0
      %1202 = vmatprep.subr.mxu0 0.0
      %1203 = vmatpush1.msra.mxu0 0.0
      %1204 = vmatprep.subr.mxu0 0.0
      %1205 = vmatpush1.msra.mxu0 0.0
      %1206 = vmatprep.subr.mxu0 0.0
      %1207 = vmatpush1.msra.mxu0 0.0
      %1208 = vmatprep.subr.mxu0 0.0
      %1209 = vmatpush1.msra.mxu0 0.0
      %1210 = vmatprep.subr.mxu0 0.0
      %1211 = vmatpush1.msra.mxu0 0.0
      %1212 = vmatprep.subr.mxu0 0.0
      %1213 = vmatpush1.msra.mxu0 0.0
      %1214 = vmatprep.subr.mxu0 0.0
      %1215 = vmatpush1.msra.mxu0 0.0
      %1216 = vmatprep.subr.mxu0 0.0
      %1217 = vmatpush1.msra.mxu0 0.0
      %1218 = vmatprep.subr.mxu0 0.0
      %1219 = vmatpush1.msra.mxu0 %v1156
      %1220 = vmatprep.subr.mxu0 0.0
      %1221 = vmatpush2.msra.mxu0 0.0
      %1222 = vmatprep.subr.mxu0 0.0
      %1223 = vmatpush2.msra.mxu0 0.0
      %1224 = vmatprep.subr.mxu0 0.0
      %1225 = vmatpush2.msra.mxu0 0.0
      %1226 = vmatprep.subr.mxu0 0.0
      %1227 = vmatpush2.msra.mxu0 0.0
      %1228 = vmatprep.subr.mxu0 0.0
      %1229 = vmatpush2.msra.mxu0 0.0
      %1230 = vmatprep.subr.mxu0 0.0
      %1231 = vmatpush2.msra.mxu0 0.0
      %1232 = vmatprep.subr.mxu0 0.0
      %1233 = vmatpush2.msra.mxu0 0.0
      %1234 = vmatprep.subr.mxu0 0.0
      %1235 = vmatpush2.msra.mxu0 0.0
      %1236 = vmatprep.subr.mxu0 0.0
      %1237 = vmatpush2.msra.mxu0 0.0
      %1238 = vmatprep.subr.mxu0 0.0
      %1239 = vmatpush2.msra.mxu0 0.0
      %1240 = vmatprep.subr.mxu0 0.0
      %1241 = vmatpush2.msra.mxu0 0.0
      %1242 = vmatprep.subr.mxu0 0.0
      %1243 = vmatpush2.msra.mxu0 0.0
      %1244 = vmatprep.subr.mxu0 0.0
      %1245 = vmatpush2.msra.mxu0 0.0
      %1246 = vmatprep.subr.mxu0 0.0
      %1247 = vmatpush2.msra.mxu0 0.0
      %1248 = vmatprep.subr.mxu0 0.0
      %1249 = vmatpush2.msra.mxu0 0.0
      %1250 = vmatprep.subr.mxu0 0.0
      %1251 = vmatpush2.msra.mxu0 0.0
      %1252 = vmatprep.mubr.f32.mxu0 0.0
      %1253 = vmatmul.mubr.f32.gmra.mxu0 %v1165
      %v1254 = vpop.f32.mrf.mxu0
      %v1255 = vadd.f32 %v1162, %v1254
      %v1256 = vpop.f32.mrf.mxu0
      %1257 = vmatprep.mubr.f32.mxu0 0.0
      %1258 = vmatmul.mubr.f32.gmra.mxu0 %v1168
      %v1259 = vpop.f32.mrf.mxu0
      %v1260 = vadd.f32 %v1162, %v1259
      %v1261 = vpop.f32.mrf.mxu0
      %1262 = vmatprep.mubr.f32.mxu0 0.0
      %1263 = vmatmul.mubr.f32.gmra.mxu0 %v1171
      %v1264 = vpop.f32.mrf.mxu0
      %v1265 = vadd.f32 %v1162, %v1264
      %v1266 = vpop.f32.mrf.mxu0
      %1267 = vmatprep.mubr.f32.mxu0 0.0
      %1268 = vmatmul.mubr.f32.gmra.mxu0 %v1174
      %v1269 = vpop.f32.mrf.mxu0
      %v1270 = vadd.f32 %v1162, %v1269
      %v1271 = vpop.f32.mrf.mxu0
      %1272 = vmatprep.mubr.f32.mxu0 0.0
      %1273 = vmatmul.mubr.f32.gmra.mxu0 %v1177
      %v1274 = vpop.f32.mrf.mxu0
      %v1275 = vadd.f32 %v1162, %v1274
      %v1276 = vpop.f32.mrf.mxu0
      %1277 = vmatprep.mubr.f32.mxu0 0.0
      %1278 = vmatmul.mubr.f32.gmra.mxu0 %v1180
      %v1279 = vpop.f32.mrf.mxu0
      %v1280 = vadd.f32 %v1162, %v1279
      %v1281 = vpop.f32.mrf.mxu0
      %1282 = vmatprep.mubr.f32.mxu0 0.0
      %1283 = vmatmul.mubr.f32.gmra.mxu0 %v1183
      %v1284 = vpop.f32.mrf.mxu0
      %v1285 = vadd.f32 %v1162, %v1284
      %v1286 = vpop.f32.mrf.mxu0
      %1287 = vmatprep.mubr.f32.mxu0 0.0
      %1288 = vmatmul.mubr.f32.gmra.mxu0 %v1186
      %v1289 = vpop.f32.mrf.mxu0
      %v1290 = vadd.f32 %v1162, %v1289
      %v1291 = vpop.f32.mrf.mxu0
      %1292 = vdwg.mxu0
      %v1293 = vsel %vm793, %v1000, 0.0
      %v1294 = vsel %vm793, %v1001, 0.0
      %v1295 = vadd.f32 %v1293, %v1294
      %v1296 = vsel %vm793, %v1002, 0.0
      %v1297 = vadd.f32 %v1295, %v1296
      %v1298 = vsel %vm793, %v1003, 0.0
      %v1299 = vadd.f32 %v1297, %v1298
      %v1300 = vsel %vm793, %v1004, 0.0
      %v1301 = vadd.f32 %v1299, %v1300
      %v1302 = vsel %vm793, %v1005, 0.0
      %v1303 = vadd.f32 %v1301, %v1302
      %v1304 = vsel %vm793, %v1006, 0.0
      %v1305 = vadd.f32 %v1303, %v1304
      %v1306 = vsel %vm793, %v1007, 0.0
      %v1307 = vadd.f32 %v1305, %v1306
      %v1308 = vrot.slane %v1307, 4
      %v1309 = vadd.f32 %v1307, %v1308
      %v1310 = vrot.slane %v1309, 2
      %v1311 = vadd.f32 %v1309, %v1310
      %v1312 = vrot.slane %v1311, 1
      %v1313 = vadd.f32 %v1311, %v1312
      %v1314 = vrcp.pop 64.0
      %v1315 = vmul.f32 %v1313, %v1314
      %v1316 = vld [vmem:[%s8] sm:$0xff]
      %v1317 = vld [vmem:[%s8 + $0x8] sm:$0xff]
      %v1318 = vld [vmem:[%s8 + $0x10] sm:$0xff]
      %v1319 = vld [vmem:[%s8 + $0x18] sm:$0xff]
      %v1320 = vld [vmem:[%s9] sm:$0x1]
      %v1322 = vsel %vm793, %v1315, 0
      %1324 = vmatprep.subr.mxu0 0.0
      %1325 = vmatpush1.msra.mxu0 0.0
      %1326 = vmatprep.subr.mxu0 0.0
      %1327 = vmatpush1.msra.mxu0 0.0
      %1328 = vmatprep.subr.mxu0 0.0
      %1329 = vmatpush1.msra.mxu0 0.0
      %1330 = vmatprep.subr.mxu0 0.0
      %1331 = vmatpush1.msra.mxu0 0.0
      %1332 = vmatprep.subr.mxu0 0.0
      %1333 = vmatpush1.msra.mxu0 0.0
      %1334 = vmatprep.subr.mxu0 0.0
      %1335 = vmatpush1.msra.mxu0 0.0
      %1336 = vmatprep.subr.mxu0 0.0
      %1337 = vmatpush1.msra.mxu0 0.0
      %1338 = vmatprep.subr.mxu0 0.0
      %1339 = vmatpush1.msra.mxu0 0.0
      %1340 = vmatprep.subr.mxu0 0.0
      %1341 = vmatpush1.msra.mxu0 0.0
      %1342 = vmatprep.subr.mxu0 0.0
      %1343 = vmatpush1.msra.mxu0 0.0
      %1344 = vmatprep.subr.mxu0 0.0
      %1345 = vmatpush1.msra.mxu0 0.0
      %1346 = vmatprep.subr.mxu0 0.0
      %1347 = vmatpush1.msra.mxu0 0.0
      %1348 = vmatprep.subr.mxu0 0.0
      %1349 = vmatpush1.msra.mxu0 %v1319
      %1350 = vmatprep.subr.mxu0 0.0
      %1351 = vmatpush1.msra.mxu0 %v1318
      %1352 = vmatprep.subr.mxu0 0.0
      %1353 = vmatpush1.msra.mxu0 %v1317
      %1354 = vmatprep.subr.mxu0 0.0
      %1355 = vmatpush1.msra.mxu0 %v1316
      %1356 = vmatprep.subr.mxu0 0.0
      %1357 = vmatpush2.msra.mxu0 0.0
      %1358 = vmatprep.subr.mxu0 0.0
      %1359 = vmatpush2.msra.mxu0 0.0
      %1360 = vmatprep.subr.mxu0 0.0
      %1361 = vmatpush2.msra.mxu0 0.0
      %1362 = vmatprep.subr.mxu0 0.0
      %1363 = vmatpush2.msra.mxu0 0.0
      %1364 = vmatprep.subr.mxu0 0.0
      %1365 = vmatpush2.msra.mxu0 0.0
      %1366 = vmatprep.subr.mxu0 0.0
      %1367 = vmatpush2.msra.mxu0 0.0
      %1368 = vmatprep.subr.mxu0 0.0
      %1369 = vmatpush2.msra.mxu0 0.0
      %1370 = vmatprep.subr.mxu0 0.0
      %1371 = vmatpush2.msra.mxu0 0.0
      %1372 = vmatprep.subr.mxu0 0.0
      %1373 = vmatpush2.msra.mxu0 0.0
      %1374 = vmatprep.subr.mxu0 0.0
      %1375 = vmatpush2.msra.mxu0 0.0
      %1376 = vmatprep.subr.mxu0 0.0
      %1377 = vmatpush2.msra.mxu0 0.0
      %1378 = vmatprep.subr.mxu0 0.0
      %1379 = vmatpush2.msra.mxu0 0.0
      %1380 = vmatprep.subr.mxu0 0.0
      %1381 = vmatpush2.msra.mxu0 0.0
      %1382 = vmatprep.subr.mxu0 0.0
      %1383 = vmatpush2.msra.mxu0 0.0
      %1384 = vmatprep.subr.mxu0 0.0
      %1385 = vmatpush2.msra.mxu0 0.0
      %1386 = vmatprep.subr.mxu0 0.0
      %1387 = vmatpush2.msra.mxu0 0.0
      %1388 = vmatprep.mubr.f32.mxu0 0.0
      %1389 = vmatmul.mubr.f32.gmra.mxu0 %v1322
      %v1390 = vpop.f32.mrf.mxu0
      %v1391 = vadd.f32 %v1320, %v1390
      %v1392 = vpop.f32.mrf.mxu0
      %1393 = vdwg.mxu0
      %v1394 = vmax.f32 %v1391, 0.0
      %v1395 = vld [vmem:[%s10] sm:$0x3]
      %v1396 = vld [vmem:[%s11] sm:$0x1]
      %vm1397 = vcmask 15360
      %v1399 = vsel %vm1397, %v1394, 0
      %vm1401 = vcmask 1041408
      %v1403 = vsel %vm1401, %v1395, 0
      %1405 = vmatprep.subr.mxu0 0.0
      %1406 = vmatpush1.msra.mxu0 0.0
      %1407 = vmatprep.subr.mxu0 0.0
      %1408 = vmatpush1.msra.mxu0 0.0
      %1409 = vmatprep.subr.mxu0 0.0
      %1410 = vmatpush1.msra.mxu0 0.0
      %1411 = vmatprep.subr.mxu0 0.0
      %1412 = vmatpush1.msra.mxu0 0.0
      %1413 = vmatprep.subr.mxu0 0.0
      %1414 = vmatpush1.msra.mxu0 0.0
      %1415 = vmatprep.subr.mxu0 0.0
      %1416 = vmatpush1.msra.mxu0 0.0
      %1417 = vmatprep.subr.mxu0 0.0
      %1418 = vmatpush1.msra.mxu0 0.0
      %1419 = vmatprep.subr.mxu0 0.0
      %1420 = vmatpush1.msra.mxu0 0.0
      %1421 = vmatprep.subr.mxu0 0.0
      %1422 = vmatpush1.msra.mxu0 0.0
      %1423 = vmatprep.subr.mxu0 0.0
      %1424 = vmatpush1.msra.mxu0 0.0
      %1425 = vmatprep.subr.mxu0 0.0
      %1426 = vmatpush1.msra.mxu0 0.0
      %1427 = vmatprep.subr.mxu0 0.0
      %1428 = vmatpush1.msra.mxu0 0.0
      %1429 = vmatprep.subr.mxu0 0.0
      %1430 = vmatpush1.msra.mxu0 0.0
      %1431 = vmatprep.subr.mxu0 0.0
      %1432 = vmatpush1.msra.mxu0 0.0
      %1433 = vmatprep.subr.mxu0 0.0
      %1434 = vmatpush1.msra.mxu0 0.0
      %1435 = vmatprep.subr.mxu0 0.0
      %1436 = vmatpush1.msra.mxu0 %v1403
      %1437 = vmatprep.subr.mxu0 0.0
      %1438 = vmatpush2.msra.mxu0 0.0
      %1439 = vmatprep.subr.mxu0 0.0
      %1440 = vmatpush2.msra.mxu0 0.0
      %1441 = vmatprep.subr.mxu0 0.0
      %1442 = vmatpush2.msra.mxu0 0.0
      %1443 = vmatprep.subr.mxu0 0.0
      %1444 = vmatpush2.msra.mxu0 0.0
      %1445 = vmatprep.subr.mxu0 0.0
      %1446 = vmatpush2.msra.mxu0 0.0
      %1447 = vmatprep.subr.mxu0 0.0
      %1448 = vmatpush2.msra.mxu0 0.0
      %1449 = vmatprep.subr.mxu0 0.0
      %1450 = vmatpush2.msra.mxu0 0.0
      %1451 = vmatprep.subr.mxu0 0.0
      %1452 = vmatpush2.msra.mxu0 0.0
      %1453 = vmatprep.subr.mxu0 0.0
      %1454 = vmatpush2.msra.mxu0 0.0
      %1455 = vmatprep.subr.mxu0 0.0
      %1456 = vmatpush2.msra.mxu0 0.0
      %1457 = vmatprep.subr.mxu0 0.0
      %1458 = vmatpush2.msra.mxu0 0.0
      %1459 = vmatprep.subr.mxu0 0.0
      %1460 = vmatpush2.msra.mxu0 0.0
      %1461 = vmatprep.subr.mxu0 0.0
      %1462 = vmatpush2.msra.mxu0 0.0
      %1463 = vmatprep.subr.mxu0 0.0
      %1464 = vmatpush2.msra.mxu0 0.0
      %1465 = vmatprep.subr.mxu0 0.0
      %1466 = vmatpush2.msra.mxu0 0.0
      %1467 = vmatprep.subr.mxu0 0.0
      %1468 = vmatpush2.msra.mxu0 0.0
      %1469 = vmatprep.mubr.f32.mxu0 0.0
      %1470 = vmatmul.mubr.f32.gmra.mxu0 %v1399
      %v1471 = vpop.f32.mrf.mxu0
      %v1472 = vadd.f32 %v1396, %v1471
      %v1473 = vpop.f32.mrf.mxu0
      %1474 = vdwg.mxu0
      %v1475 = vlaneseq
      %v1476 = vshrl.u32 %v1475, 7
      %v1477 = vsub.s32 0, %v1476
      %v1478 = vrot.slane %v1472, %v1477
      %v1479 = vadd.f32 %v1255, %v1478
      %v1480 = vadd.f32 %v1260, %v1478
      %v1481 = vadd.f32 %v1265, %v1478
      %v1482 = vadd.f32 %v1270, %v1478
      %v1483 = vadd.f32 %v1275, %v1478
      %v1484 = vadd.f32 %v1280, %v1478
      %v1485 = vadd.f32 %v1285, %v1478
      %v1486 = vadd.f32 %v1290, %v1478
      %v1487 = vxor.u32 %v1479, 2147483648
      %v1488 = vxor.u32 %v1480, 2147483648
      %v1489 = vxor.u32 %v1481, 2147483648
      %v1490 = vxor.u32 %v1482, 2147483648
      %v1491 = vxor.u32 %v1483, 2147483648
      %v1492 = vxor.u32 %v1484, 2147483648
      %v1493 = vxor.u32 %v1485, 2147483648
      %v1494 = vxor.u32 %v1486, 2147483648
      %v1495 = vmul.f32 %v1487, 1.442695
      %v1496 = vpow.pop %v1495
      %v1497 = vmul.f32 %v1488, 1.442695
      %v1498 = vpow.pop %v1497
      %v1499 = vmul.f32 %v1489, 1.442695
      %v1500 = vpow.pop %v1499
      %v1501 = vmul.f32 %v1490, 1.442695
      %v1502 = vpow.pop %v1501
      %v1503 = vmul.f32 %v1491, 1.442695
      %v1504 = vpow.pop %v1503
      %v1505 = vmul.f32 %v1492, 1.442695
      %v1506 = vpow.pop %v1505
      %v1507 = vmul.f32 %v1493, 1.442695
      %v1508 = vpow.pop %v1507
      %v1509 = vmul.f32 %v1494, 1.442695
      %v1510 = vpow.pop %v1509
      %v1511 = vadd.f32 %v1496, 1.0
      %v1512 = vadd.f32 %v1498, 1.0
      %v1513 = vadd.f32 %v1500, 1.0
      %v1514 = vadd.f32 %v1502, 1.0
      %v1515 = vadd.f32 %v1504, 1.0
      %v1516 = vadd.f32 %v1506, 1.0
      %v1517 = vadd.f32 %v1508, 1.0
      %v1518 = vadd.f32 %v1510, 1.0
      %v1519 = vrcp.pop %v1511
      %v1520 = vmul.f32 1.0, %v1519
      %v1521 = vrcp.pop %v1512
      %v1522 = vmul.f32 1.0, %v1521
      %v1523 = vrcp.pop %v1513
      %v1524 = vmul.f32 1.0, %v1523
      %v1525 = vrcp.pop %v1514
      %v1526 = vmul.f32 1.0, %v1525
      %v1527 = vrcp.pop %v1515
      %v1528 = vmul.f32 1.0, %v1527
      %v1529 = vrcp.pop %v1516
      %v1530 = vmul.f32 1.0, %v1529
      %v1531 = vrcp.pop %v1517
      %v1532 = vmul.f32 1.0, %v1531
      %v1533 = vrcp.pop %v1518
      %v1534 = vmul.f32 1.0, %v1533
      %v1535 = vmul.f32 %v984, 2.0
      %v1536 = vmul.f32 %v985, 2.0
      %v1537 = vmul.f32 %v986, 2.0
      %v1538 = vmul.f32 %v987, 2.0
      %v1539 = vmul.f32 %v988, 2.0
      %v1540 = vmul.f32 %v989, 2.0
      %v1541 = vmul.f32 %v990, 2.0
      %v1542 = vmul.f32 %v991, 2.0
      %v1543 = vmul.f32 %v1535, %v1520
      %v1544 = vmul.f32 %v1536, %v1522
      %v1545 = vmul.f32 %v1537, %v1524
      %v1546 = vmul.f32 %v1538, %v1526
      %v1547 = vmul.f32 %v1539, %v1528
      %v1548 = vmul.f32 %v1540, %v1530
      %v1549 = vmul.f32 %v1541, %v1532
      %v1550 = vmul.f32 %v1542, %v1534
      %v1551 = vmul.f32 %v992, 2.0
      %v1552 = vmul.f32 %v993, 2.0
      %v1553 = vmul.f32 %v994, 2.0
      %v1554 = vmul.f32 %v995, 2.0
      %v1555 = vmul.f32 %v996, 2.0
      %v1556 = vmul.f32 %v997, 2.0
      %v1557 = vmul.f32 %v998, 2.0
      %v1558 = vmul.f32 %v999, 2.0
      %v1559 = vsub.f32 1.0, %v1520
      %v1560 = vsub.f32 1.0, %v1522
      %v1561 = vsub.f32 1.0, %v1524
      %v1562 = vsub.f32 1.0, %v1526
      %v1563 = vsub.f32 1.0, %v1528
      %v1564 = vsub.f32 1.0, %v1530
      %v1565 = vsub.f32 1.0, %v1532
      %v1566 = vsub.f32 1.0, %v1534
      %v1567 = vmul.f32 %v1551, %v1559
      %v1568 = vmul.f32 %v1552, %v1560
      %v1569 = vmul.f32 %v1553, %v1561
      %v1570 = vmul.f32 %v1554, %v1562
      %v1571 = vmul.f32 %v1555, %v1563
      %v1572 = vmul.f32 %v1556, %v1564
      %v1573 = vmul.f32 %v1557, %v1565
      %v1574 = vmul.f32 %v1558, %v1566
      %v1575 = vadd.f32 %v1543, %v1567
      %v1576 = vadd.f32 %v1544, %v1568
      %v1577 = vadd.f32 %v1545, %v1569
      %v1578 = vadd.f32 %v1546, %v1570
      %v1579 = vadd.f32 %v1547, %v1571
      %v1580 = vadd.f32 %v1548, %v1572
      %v1581 = vadd.f32 %v1549, %v1573
      %v1582 = vadd.f32 %v1550, %v1574
      %1583 = vst.msk [vmem:[%s433] sm:$0xff] %vm793, %v1575
      %1584 = vst.msk [vmem:[%s433 + $0x8] sm:$0xff] %vm793, %v1576
      %1585 = vst.msk [vmem:[%s433 + $0x10] sm:$0xff] %vm793, %v1577
      %1586 = vst.msk [vmem:[%s433 + $0x18] sm:$0xff] %vm793, %v1578
      %1587 = vst.msk [vmem:[%s433 + $0x20] sm:$0xff] %vm793, %v1579
      %1588 = vst.msk [vmem:[%s433 + $0x28] sm:$0xff] %vm793, %v1580
      %1589 = vst.msk [vmem:[%s433 + $0x30] sm:$0xff] %vm793, %v1581
      %1590 = vst.msk [vmem:[%s433 + $0x38] sm:$0xff] %vm793, %v1582
      %p1591 = scmp.lt.s32.totalorder %s23, 1
      %s1592 = scalar_select %p1591, %s23, 1
      %s1593 = smul.addr %s1592, 8
      %s1594 = smul.addr %s1593, 8
      %s1595 = scalar_lea.vmem %s12, %s1594
      // Predicated region
      $region69: #{tpu_custom_call.1} parent=67 // pred_check
        %p1596 = pneg %p303
      $region70: #{tpu_custom_call.1} parent=67 // pred_check_branch
        %1598 = sbr.rel (%p1596) target = $region72
      $region71: #{tpu_custom_call.1} parent=67 // pred_region
        _
      $region72: #{tpu_custom_call.1} parent=67 // pred_fallthru
        _
    $region68: #{tpu_custom_call.1} parent=5 // pred_fallthru
      _
    %p1599 = scmp.le.s32.totalorder 2, %s18
    // Predicated region
    $region73: #{tpu_custom_call.1} parent=5 // pred_check
      %p1600 = pneg %p1599
    $region74: #{tpu_custom_call.1} parent=5 // pred_check_branch
      %1602 = sbr.rel (%p1600) target = $region76
    $region75: #{tpu_custom_call.1} parent=5 // pred_region
      %s1603 = ssub.s32 %s18, 2
      // Predicated region
      $region77: #{tpu_custom_call.1} parent=75 // pred_check
        %p1604 = pneg %p309
      $region78: #{tpu_custom_call.1} parent=75 // pred_check_branch
        %1606 = sbr.rel (%p1604) target = $region80
      $region79: #{tpu_custom_call.1} parent=75 // pred_region
        %p1607 = scmp.lt.s32.totalorder %s24, 1
        %s1608 = scalar_select %p1607, %s24, 1
        %s1609 = smul.addr %s1608, 8
        %s1610 = smul.addr %s1609, 8
        %s1611 = scalar_lea.vmem %s12, %s1610
      $region80: #{tpu_custom_call.1} parent=75 // pred_fallthru
        _
    $region76: #{tpu_custom_call.1} parent=5 // pred_fallthru
      _
  $region6: #{tpu_custom_call.1} parent=0 // loop_footer
    %s22 = sadd.s32 1, %s18
  $region7: #{tpu_custom_call.1} parent=0 // loop_footer_branch
    %17 = sbr.rel target = $region3
  $region8: #{tpu_custom_call.1} parent=0 // loop_exit
    _

</llo_original>
